<compile_context>
chip_gen: v7x
topology: tpu7x:2x2x1
jax: 0.10.0
libtpu: 0.0.40
codegen_flags: <defaults>
</compile_context>

<pallas_src>
import math
import functools

import jax
import jax.numpy as jnp
from jax.experimental import pallas as pl
from jax.experimental.pallas import tpu as pltpu

_GELU_C = math.sqrt(2.0 / math.pi)


def _layer_norm(v, g, b, eps=1e-5):
    mu = jnp.mean(v, axis=-1, keepdims=True)
    var = jnp.mean(jnp.square(v - mu), axis=-1, keepdims=True)
    return (v - mu) * jax.lax.rsqrt(var + eps) * g + b


def fused_transformer_kernel(
    x_ref,                      # (tile_rows, D)  tokens (pos embedding already added)
    ln1g_ref, ln1b_ref,         # (1, 1, D)
    wqkv_ref,                   # (1, D, 3*inner)
    wo_ref, bo_ref,             # (1, inner, D), (1, 1, D)
    ln2g_ref, ln2b_ref,         # (1, 1, D)
    w1_ref, b1_ref,             # (1, D, mlp), (1, 1, mlp)
    w2_ref, b2_ref,             # (1, mlp, D), (1, 1, D)
    o_ref,                      # (tile_rows, D)
    state_ref,                  # VMEM scratch (tile_rows, D) f32 — resident activation
    *, batch_tile, seq, heads, dim_head, scale,
):
    inner = heads * dim_head
    rows = batch_tile * seq

    # First layer of this batch tile: seed the resident activation from the input.
    @pl.when(pl.program_id(1) == 0)
    def _seed():
        state_ref[...] = x_ref[...].astype(jnp.float32)

    x = state_ref[...]                                        # (rows, D), f32

    # ---------------- Attention block: x + Wo @ Attn(LN(x)) ----------------
    xn = _layer_norm(x, ln1g_ref[0], ln1b_ref[0])
    qkv = jnp.dot(xn, wqkv_ref[0], preferred_element_type=jnp.float32)   # (rows, 3*inner)

    # fold the softmax scale into q; split batch back out of the row dim
    # (leading-dim reshapes only -> no lane relayout).
    q = (qkv[:, 0 * inner:1 * inner] * scale).reshape(batch_tile, seq, inner)
    k = qkv[:, 1 * inner:2 * inner].reshape(batch_tile, seq, inner)
    v = qkv[:, 2 * inner:3 * inner].reshape(batch_tile, seq, inner)

    head_ctx = []
    for h in range(heads):                                    # static, small, unrolled
        sl = slice(h * dim_head, (h + 1) * dim_head)
        qh, kh, vh = q[..., sl], k[..., sl], v[..., sl]       # (TB, N, dh)
        # batched over the batch dim; contraction over last axes (no explicit .T)
        s = jnp.einsum('bnd,bmd->bnm', qh, kh,
                       preferred_element_type=jnp.float32)    # (TB, N, N)
        s = s - jnp.max(s, axis=-1, keepdims=True)
        p = jnp.exp(s)
        p = p * pl.reciprocal(jnp.sum(p, axis=-1, keepdims=True), approx=True)
        head_ctx.append(jnp.einsum('bnm,bmd->bnd', p, vh,
                                   preferred_element_type=jnp.float32))
    ctx = jnp.concatenate(head_ctx, axis=-1).reshape(rows, inner)
    attn_out = jnp.dot(ctx, wo_ref[0], preferred_element_type=jnp.float32) + bo_ref[0]
    x1 = x + attn_out

    # ---------------- FeedForward block: x1 + FF(LN(x1)) ----------------
    xn2 = _layer_norm(x1, ln2g_ref[0], ln2b_ref[0])
    h1 = jnp.dot(xn2, w1_ref[0], preferred_element_type=jnp.float32) + b1_ref[0]
    # tanh-approximation GELU, exactly as in the PyTorch module
    h1 = 0.5 * h1 * (1.0 + jnp.tanh(_GELU_C * (h1 + 0.044715 * h1 * h1 * h1)))
    ff = jnp.dot(h1, w2_ref[0], preferred_element_type=jnp.float32) + b2_ref[0]

    new_x = x1 + ff
    state_ref[...] = new_x
    o_ref[...] = new_x.astype(o_ref.dtype)


def fused_transformer(x2d, params, *, batch, seq, heads, dim_head, batch_tile=None):
    """x2d: (batch*seq, D) with positional embedding already added.
    params: dict of weights stacked along a leading depth axis (see init_params)."""
    rows, D = x2d.shape
    assert rows == batch * seq
    depth = params["wqkv"].shape[0]
    inner = heads * dim_head
    mlp = params["w1"].shape[-1]
    if batch_tile is None:
        batch_tile = batch
    assert batch % batch_tile == 0
    tile_rows = batch_tile * seq
    n_tiles = batch // batch_tile
    scale = dim_head ** (-0.5)

    kernel = functools.partial(
        fused_transformer_kernel,
        batch_tile=batch_tile, seq=seq, heads=heads, dim_head=dim_head, scale=scale,
    )

    def w_spec(shape):
        # one layer's slice of a depth-stacked weight, streamed along the depth axis
        return pl.BlockSpec((1,) + shape, lambda bt, l, _s=shape: (l,) + (0,) * len(_s))

    return pl.pallas_call(
        kernel,
        out_shape=jax.ShapeDtypeStruct((rows, D), x2d.dtype),
        grid_spec=pltpu.PrefetchScalarGridSpec(
            num_scalar_prefetch=0,
            grid=(n_tiles, depth),              # depth innermost: activation stays resident
            in_specs=[
                pl.BlockSpec((tile_rows, D), lambda bt, l: (bt, 0)),   # x
                w_spec((1, D)),                 # ln1 gamma
                w_spec((1, D)),                 # ln1 beta
                w_spec((D, 3 * inner)),         # W_qkv   (in, out)
                w_spec((inner, D)),             # W_out   (in, out)
                w_spec((1, D)),                 # b_out
                w_spec((1, D)),                 # ln2 gamma
                w_spec((1, D)),                 # ln2 beta
                w_spec((D, mlp)),               # W1
                w_spec((1, mlp)),               # b1
                w_spec((mlp, D)),               # W2
                w_spec((1, D)),                 # b2
            ],
            out_specs=pl.BlockSpec((tile_rows, D), lambda bt, l: (bt, 0)),
            scratch_shapes=[pltpu.VMEM((tile_rows, D), jnp.float32)],
        ),
        compiler_params=pltpu.CompilerParams(
            dimension_semantics=("parallel", "arbitrary"),
        ),
    )(
        x2d,
        params["ln1_g"], params["ln1_b"],
        params["wqkv"],
        params["wo"], params["bo"],
        params["ln2_g"], params["ln2_b"],
        params["w1"], params["b1"],
        params["w2"], params["b2"],
    )


# ----------------------------------------------------------------------------
# Module wrapper: Temporal_Transformer_All
# ----------------------------------------------------------------------------
def init_params(key, *, num_patches, input_dim, depth, heads, dim_head, mlp_dim):
    D = input_dim
    inner = heads * dim_head
    k_pos, k_qkv, k_o, k_1, k_2 = jax.random.split(key, 5)
    pos_embedding = jax.random.normal(k_pos, (1, num_patches, D), jnp.float32)
    # Weights stored stacked over depth and already transposed to (in, out).
    params = dict(
        ln1_g=jnp.ones((depth, 1, D), jnp.float32),
        ln1_b=jnp.zeros((depth, 1, D), jnp.float32),
        wqkv=0.02 * jax.random.normal(k_qkv, (depth, D, 3 * inner), jnp.float32),
        wo=0.02 * jax.random.normal(k_o, (depth, inner, D), jnp.float32),
        bo=jnp.zeros((depth, 1, D), jnp.float32),
        ln2_g=jnp.ones((depth, 1, D), jnp.float32),
        ln2_b=jnp.zeros((depth, 1, D), jnp.float32),
        w1=0.02 * jax.random.normal(k_1, (depth, D, mlp_dim), jnp.float32),
        b1=jnp.zeros((depth, 1, mlp_dim), jnp.float32),
        w2=0.02 * jax.random.normal(k_2, (depth, mlp_dim, D), jnp.float32),
        b2=jnp.zeros((depth, 1, D), jnp.float32),
    )
    return pos_embedding, params


def temporal_transformer_all(x, pos_embedding, params, *, num_patches, input_dim,
                             heads, dim_head, batch_tile=None):
    # glue: x.contiguous().view(-1, num_patches, input_dim) + positional embedding
    x = x.reshape(-1, num_patches, input_dim)
    b, n, d = x.shape
    x = x + pos_embedding[:, :n]
    x2d = x.reshape(b * n, d)                  # flatten batch into the matmul M dim
    out2d = fused_transformer(x2d, params, batch=b, seq=n, heads=heads,
                              dim_head=dim_head, batch_tile=batch_tile)
    return out2d.reshape(b, n, d)


if __name__ == "__main__":
    # small, shape-consistent configuration
    num_patches = 8
    input_dim = 32
    depth = 2
    heads = 4
    dim_head = 8
    mlp_dim = 64
    batch = 2

    key = jax.random.PRNGKey(0)
    pkey, xkey = jax.random.split(key)
    pos_embedding, params = init_params(
        pkey, num_patches=num_patches, input_dim=input_dim, depth=depth,
        heads=heads, dim_head=dim_head, mlp_dim=mlp_dim,
    )

    x = jax.random.normal(xkey, (batch, num_patches, input_dim), jnp.float32)

    fwd = jax.jit(functools.partial(
        temporal_transformer_all, num_patches=num_patches, input_dim=input_dim,
        heads=heads, dim_head=dim_head))
    out = jax.block_until_ready(fwd(x, pos_embedding, params))

    assert out.shape == (batch, num_patches, input_dim)
    assert bool(jnp.all(jnp.isfinite(out)))
    print("KERNEL_OK")
</pallas_src>

<mosaic_0001>
module attributes {stable_mosaic.version = 11 : i64} {
  func.func @fused_transformer_kernel(%arg0: i32, %arg1: i32, %arg2: memref<16x32xf32, #tpu.memory_space<vmem>>, %arg3: memref<1x1x32xf32, #tpu.memory_space<vmem>>, %arg4: memref<1x1x32xf32, #tpu.memory_space<vmem>>, %arg5: memref<1x32x96xf32, #tpu.memory_space<vmem>>, %arg6: memref<1x32x32xf32, #tpu.memory_space<vmem>>, %arg7: memref<1x1x32xf32, #tpu.memory_space<vmem>>, %arg8: memref<1x1x32xf32, #tpu.memory_space<vmem>>, %arg9: memref<1x1x32xf32, #tpu.memory_space<vmem>>, %arg10: memref<1x32x64xf32, #tpu.memory_space<vmem>>, %arg11: memref<1x1x64xf32, #tpu.memory_space<vmem>>, %arg12: memref<1x64x32xf32, #tpu.memory_space<vmem>>, %arg13: memref<1x1x32xf32, #tpu.memory_space<vmem>>, %arg14: memref<16x32xf32, #tpu.memory_space<vmem>>, %arg15: memref<16x32xf32, #tpu.memory_space<vmem>>) attributes {dimension_semantics = [#tpu.dimension_semantics<parallel>, #tpu.dimension_semantics<arbitrary>], iteration_bounds = array<i64: 1, 2>, scalar_prefetch = 0 : i64, scratch_operands = 1 : i64, tpu.core_type = #tpu.core_type<tc>, window_params = [{transform_indices = @transform_0, window_bounds = array<i64: 16, 32>}, {transform_indices = @transform_1, window_bounds = array<i64: 1, 1, 32>}, {transform_indices = @transform_2, window_bounds = array<i64: 1, 1, 32>}, {transform_indices = @transform_3, window_bounds = array<i64: 1, 32, 96>}, {transform_indices = @transform_4, window_bounds = array<i64: 1, 32, 32>}, {transform_indices = @transform_5, window_bounds = array<i64: 1, 1, 32>}, {transform_indices = @transform_6, window_bounds = array<i64: 1, 1, 32>}, {transform_indices = @transform_7, window_bounds = array<i64: 1, 1, 32>}, {transform_indices = @transform_8, window_bounds = array<i64: 1, 32, 64>}, {transform_indices = @transform_9, window_bounds = array<i64: 1, 1, 64>}, {transform_indices = @transform_10, window_bounds = array<i64: 1, 64, 32>}, {transform_indices = @transform_11, window_bounds = array<i64: 1, 1, 32>}, {transform_indices = @transform_12, window_bounds = array<i64: 16, 32>}]} {
    %c0_i32 = arith.constant 0 : i32
    %0 = arith.cmpi eq, %arg1, %c0_i32 : i32
    %1 = arith.extui %0 : i1 to i32
    %c0_i32_0 = arith.constant 0 : i32
    %2 = arith.cmpi ne, %1, %c0_i32_0 : i32
    scf.if %2 {
      %c0_73 = arith.constant 0 : index
      %c0_74 = arith.constant 0 : index
      %167 = vector.load %arg2[%c0_73, %c0_74] : memref<16x32xf32, #tpu.memory_space<vmem>>, vector<16x32xf32>
      %c0_75 = arith.constant 0 : index
      %c0_76 = arith.constant 0 : index
      %168 = vector.load %arg15[%c0_75, %c0_76] : memref<16x32xf32, #tpu.memory_space<vmem>>, vector<16x32xf32>
      tpu.vector_store %arg15[%c0_75, %c0_76], %167 {strides = array<i32>} : memref<16x32xf32, #tpu.memory_space<vmem>>, vector<16x32xf32>,
    } else {
    }
    %c0 = arith.constant 0 : index
    %c0_1 = arith.constant 0 : index
    %3 = vector.load %arg15[%c0, %c0_1] : memref<16x32xf32, #tpu.memory_space<vmem>>, vector<16x32xf32>
    %c0_2 = arith.constant 0 : index
    %c0_3 = arith.constant 0 : index
    %c0_4 = arith.constant 0 : index
    %4 = vector.load %arg3[%c0_2, %c0_3, %c0_4] : memref<1x1x32xf32, #tpu.memory_space<vmem>>, vector<1x1x32xf32>
    %5 = vector.shape_cast %4 : vector<1x1x32xf32> to vector<1x32xf32>
    %c0_5 = arith.constant 0 : index
    %c0_6 = arith.constant 0 : index
    %c0_7 = arith.constant 0 : index
    %6 = vector.load %arg4[%c0_5, %c0_6, %c0_7] : memref<1x1x32xf32, #tpu.memory_space<vmem>>, vector<1x1x32xf32>
    %7 = vector.shape_cast %6 : vector<1x1x32xf32> to vector<1x32xf32>
    %cst = arith.constant dense<0.000000e+00> : vector<16xf32>
    %8 = vector.multi_reduction <add>, %3, %cst [1] : vector<16x32xf32> to vector<16xf32>
    %9 = vector.shape_cast %8 : vector<16xf32> to vector<16x1xf32>
    %cst_8 = arith.constant 3.200000e+01 : f32
    %10 = vector.broadcast %cst_8 : f32 to vector<16x1xf32>
    %11 = arith.divf %9, %10 : vector<16x1xf32>
    %12 = vector.broadcast %11 : vector<16x1xf32> to vector<16x32xf32>
    %13 = arith.subf %3, %12 : vector<16x32xf32>
    %14 = arith.mulf %13, %13 : vector<16x32xf32>
    %cst_9 = arith.constant dense<0.000000e+00> : vector<16xf32>
    %15 = vector.multi_reduction <add>, %14, %cst_9 [1] : vector<16x32xf32> to vector<16xf32>
    %16 = vector.shape_cast %15 : vector<16xf32> to vector<16x1xf32>
    %cst_10 = arith.constant 3.200000e+01 : f32
    %17 = vector.broadcast %cst_10 : f32 to vector<16x1xf32>
    %18 = arith.divf %16, %17 : vector<16x1xf32>
    %19 = vector.broadcast %11 : vector<16x1xf32> to vector<16x32xf32>
    %20 = arith.subf %3, %19 : vector<16x32xf32>
    %cst_11 = arith.constant 9.99999974E-6 : f32
    %21 = vector.broadcast %cst_11 : f32 to vector<16x1xf32>
    %22 = arith.addf %18, %21 : vector<16x1xf32>
    %23 = math.rsqrt %22 : vector<16x1xf32>
    %24 = vector.broadcast %23 : vector<16x1xf32> to vector<16x32xf32>
    %25 = arith.mulf %20, %24 : vector<16x32xf32>
    %26 = vector.broadcast %5 : vector<1x32xf32> to vector<16x32xf32>
    %27 = arith.mulf %25, %26 : vector<16x32xf32>
    %28 = vector.broadcast %7 : vector<1x32xf32> to vector<16x32xf32>
    %29 = arith.addf %27, %28 : vector<16x32xf32>
    %c0_12 = arith.constant 0 : index
    %c0_13 = arith.constant 0 : index
    %c0_14 = arith.constant 0 : index
    %30 = vector.load %arg5[%c0_12, %c0_13, %c0_14] : memref<1x32x96xf32, #tpu.memory_space<vmem>>, vector<1x32x96xf32>
    %31 = vector.shape_cast %30 : vector<1x32x96xf32> to vector<32x96xf32>
    %cst_15 = arith.constant dense<0.000000e+00> : vector<16x96xf32>
    %32 = tpu.matmul %29, %31, %cst_15 {dimension_numbers = #tpu.dot_dimension_numbers<[1], [0], [0], [1], [0, 0, 1, 1], [], []>} : vector<16x32xf32>, vector<32x96xf32>, vector<16x96xf32> -> vector<16x96xf32>
    %33 = vector.extract_strided_slice %32 {offsets = [0, 0], sizes = [16, 32], strides = [1, 1]} : vector<16x96xf32> to vector<16x32xf32>
    %cst_16 = arith.constant 0.353553385 : f32
    %34 = vector.broadcast %cst_16 : f32 to vector<16x32xf32>
    %35 = arith.mulf %33, %34 : vector<16x32xf32>
    %36 = vector.shape_cast %35 : vector<16x32xf32> to vector<2x8x32xf32>
    %37 = vector.extract_strided_slice %32 {offsets = [0, 32], sizes = [16, 32], strides = [1, 1]} : vector<16x96xf32> to vector<16x32xf32>
    %38 = vector.shape_cast %37 : vector<16x32xf32> to vector<2x8x32xf32>
    %39 = vector.extract_strided_slice %32 {offsets = [0, 64], sizes = [16, 32], strides = [1, 1]} : vector<16x96xf32> to vector<16x32xf32>
    %40 = vector.shape_cast %39 : vector<16x32xf32> to vector<2x8x32xf32>
    %41 = vector.extract_strided_slice %36 {offsets = [0, 0, 0], sizes = [2, 8, 8], strides = [1, 1, 1]} : vector<2x8x32xf32> to vector<2x8x8xf32>
    %42 = vector.extract_strided_slice %38 {offsets = [0, 0, 0], sizes = [2, 8, 8], strides = [1, 1, 1]} : vector<2x8x32xf32> to vector<2x8x8xf32>
    %43 = vector.extract_strided_slice %40 {offsets = [0, 0, 0], sizes = [2, 8, 8], strides = [1, 1, 1]} : vector<2x8x32xf32> to vector<2x8x8xf32>
    "tpu.trace_start"() <{level = 10 : i32, message = "bnd,bmd->bnm"}> : () -> ()
    %cst_17 = arith.constant dense<0.000000e+00> : vector<2x8x8xf32>
    %44 = tpu.matmul %41, %42, %cst_17 {dimension_numbers = #tpu.dot_dimension_numbers<[2], [2], [1], [1], [0, 0, 0, 1, 1, 1], [0], [0]>} : vector<2x8x8xf32>, vector<2x8x8xf32>, vector<2x8x8xf32> -> vector<2x8x8xf32>
    "tpu.trace_stop"() : () -> ()
    %cst_18 = arith.constant dense<0xFF800000> : vector<2x8xf32>
    %45 = vector.multi_reduction <maximumf>, %44, %cst_18 [2] : vector<2x8x8xf32> to vector<2x8xf32>
    %46 = vector.shape_cast %45 : vector<2x8xf32> to vector<2x8x1xf32>
    %47 = vector.broadcast %46 : vector<2x8x1xf32> to vector<2x8x8xf32>
    %48 = arith.subf %44, %47 : vector<2x8x8xf32>
    %49 = math.exp %48 : vector<2x8x8xf32>
    %cst_19 = arith.constant dense<0.000000e+00> : vector<2x8xf32>
    %50 = vector.multi_reduction <add>, %49, %cst_19 [2] : vector<2x8x8xf32> to vector<2x8xf32>
    %51 = vector.shape_cast %50 : vector<2x8xf32> to vector<2x8x1xf32>
    %52 = tpu.reciprocal %51 {approx = true} : vector<2x8x1xf32> -> vector<2x8x1xf32>
    %53 = vector.broadcast %52 : vector<2x8x1xf32> to vector<2x8x8xf32>
    %54 = arith.mulf %49, %53 : vector<2x8x8xf32>
    "tpu.trace_start"() <{level = 10 : i32, message = "bnm,bmd->bnd"}> : () -> ()
    %cst_20 = arith.constant dense<0.000000e+00> : vector<2x8x8xf32>
    %55 = tpu.matmul %54, %43, %cst_20 {dimension_numbers = #tpu.dot_dimension_numbers<[2], [1], [1], [2], [0, 0, 0, 1, 1, 2], [0], [0]>} : vector<2x8x8xf32>, vector<2x8x8xf32>, vector<2x8x8xf32> -> vector<2x8x8xf32>
    "tpu.trace_stop"() : () -> ()
    %56 = vector.extract_strided_slice %36 {offsets = [0, 0, 8], sizes = [2, 8, 8], strides = [1, 1, 1]} : vector<2x8x32xf32> to vector<2x8x8xf32>
    %57 = vector.extract_strided_slice %38 {offsets = [0, 0, 8], sizes = [2, 8, 8], strides = [1, 1, 1]} : vector<2x8x32xf32> to vector<2x8x8xf32>
    %58 = vector.extract_strided_slice %40 {offsets = [0, 0, 8], sizes = [2, 8, 8], strides = [1, 1, 1]} : vector<2x8x32xf32> to vector<2x8x8xf32>
    "tpu.trace_start"() <{level = 10 : i32, message = "bnd,bmd->bnm"}> : () -> ()
    %cst_21 = arith.constant dense<0.000000e+00> : vector<2x8x8xf32>
    %59 = tpu.matmul %56, %57, %cst_21 {dimension_numbers = #tpu.dot_dimension_numbers<[2], [2], [1], [1], [0, 0, 0, 1, 1, 1], [0], [0]>} : vector<2x8x8xf32>, vector<2x8x8xf32>, vector<2x8x8xf32> -> vector<2x8x8xf32>
    "tpu.trace_stop"() : () -> ()
    %cst_22 = arith.constant dense<0xFF800000> : vector<2x8xf32>
    %60 = vector.multi_reduction <maximumf>, %59, %cst_22 [2] : vector<2x8x8xf32> to vector<2x8xf32>
    %61 = vector.shape_cast %60 : vector<2x8xf32> to vector<2x8x1xf32>
    %62 = vector.broadcast %61 : vector<2x8x1xf32> to vector<2x8x8xf32>
    %63 = arith.subf %59, %62 : vector<2x8x8xf32>
    %64 = math.exp %63 : vector<2x8x8xf32>
    %cst_23 = arith.constant dense<0.000000e+00> : vector<2x8xf32>
    %65 = vector.multi_reduction <add>, %64, %cst_23 [2] : vector<2x8x8xf32> to vector<2x8xf32>
    %66 = vector.shape_cast %65 : vector<2x8xf32> to vector<2x8x1xf32>
    %67 = tpu.reciprocal %66 {approx = true} : vector<2x8x1xf32> -> vector<2x8x1xf32>
    %68 = vector.broadcast %67 : vector<2x8x1xf32> to vector<2x8x8xf32>
    %69 = arith.mulf %64, %68 : vector<2x8x8xf32>
    "tpu.trace_start"() <{level = 10 : i32, message = "bnm,bmd->bnd"}> : () -> ()
    %cst_24 = arith.constant dense<0.000000e+00> : vector<2x8x8xf32>
    %70 = tpu.matmul %69, %58, %cst_24 {dimension_numbers = #tpu.dot_dimension_numbers<[2], [1], [1], [2], [0, 0, 0, 1, 1, 2], [0], [0]>} : vector<2x8x8xf32>, vector<2x8x8xf32>, vector<2x8x8xf32> -> vector<2x8x8xf32>
    "tpu.trace_stop"() : () -> ()
    %71 = vector.extract_strided_slice %36 {offsets = [0, 0, 16], sizes = [2, 8, 8], strides = [1, 1, 1]} : vector<2x8x32xf32> to vector<2x8x8xf32>
    %72 = vector.extract_strided_slice %38 {offsets = [0, 0, 16], sizes = [2, 8, 8], strides = [1, 1, 1]} : vector<2x8x32xf32> to vector<2x8x8xf32>
    %73 = vector.extract_strided_slice %40 {offsets = [0, 0, 16], sizes = [2, 8, 8], strides = [1, 1, 1]} : vector<2x8x32xf32> to vector<2x8x8xf32>
    "tpu.trace_start"() <{level = 10 : i32, message = "bnd,bmd->bnm"}> : () -> ()
    %cst_25 = arith.constant dense<0.000000e+00> : vector<2x8x8xf32>
    %74 = tpu.matmul %71, %72, %cst_25 {dimension_numbers = #tpu.dot_dimension_numbers<[2], [2], [1], [1], [0, 0, 0, 1, 1, 1], [0], [0]>} : vector<2x8x8xf32>, vector<2x8x8xf32>, vector<2x8x8xf32> -> vector<2x8x8xf32>
    "tpu.trace_stop"() : () -> ()
    %cst_26 = arith.constant dense<0xFF800000> : vector<2x8xf32>
    %75 = vector.multi_reduction <maximumf>, %74, %cst_26 [2] : vector<2x8x8xf32> to vector<2x8xf32>
    %76 = vector.shape_cast %75 : vector<2x8xf32> to vector<2x8x1xf32>
    %77 = vector.broadcast %76 : vector<2x8x1xf32> to vector<2x8x8xf32>
    %78 = arith.subf %74, %77 : vector<2x8x8xf32>
    %79 = math.exp %78 : vector<2x8x8xf32>
    %cst_27 = arith.constant dense<0.000000e+00> : vector<2x8xf32>
    %80 = vector.multi_reduction <add>, %79, %cst_27 [2] : vector<2x8x8xf32> to vector<2x8xf32>
    %81 = vector.shape_cast %80 : vector<2x8xf32> to vector<2x8x1xf32>
    %82 = tpu.reciprocal %81 {approx = true} : vector<2x8x1xf32> -> vector<2x8x1xf32>
    %83 = vector.broadcast %82 : vector<2x8x1xf32> to vector<2x8x8xf32>
    %84 = arith.mulf %79, %83 : vector<2x8x8xf32>
    "tpu.trace_start"() <{level = 10 : i32, message = "bnm,bmd->bnd"}> : () -> ()
    %cst_28 = arith.constant dense<0.000000e+00> : vector<2x8x8xf32>
    %85 = tpu.matmul %84, %73, %cst_28 {dimension_numbers = #tpu.dot_dimension_numbers<[2], [1], [1], [2], [0, 0, 0, 1, 1, 2], [0], [0]>} : vector<2x8x8xf32>, vector<2x8x8xf32>, vector<2x8x8xf32> -> vector<2x8x8xf32>
    "tpu.trace_stop"() : () -> ()
    %86 = vector.extract_strided_slice %36 {offsets = [0, 0, 24], sizes = [2, 8, 8], strides = [1, 1, 1]} : vector<2x8x32xf32> to vector<2x8x8xf32>
    %87 = vector.extract_strided_slice %38 {offsets = [0, 0, 24], sizes = [2, 8, 8], strides = [1, 1, 1]} : vector<2x8x32xf32> to vector<2x8x8xf32>
    %88 = vector.extract_strided_slice %40 {offsets = [0, 0, 24], sizes = [2, 8, 8], strides = [1, 1, 1]} : vector<2x8x32xf32> to vector<2x8x8xf32>
    "tpu.trace_start"() <{level = 10 : i32, message = "bnd,bmd->bnm"}> : () -> ()
    %cst_29 = arith.constant dense<0.000000e+00> : vector<2x8x8xf32>
    %89 = tpu.matmul %86, %87, %cst_29 {dimension_numbers = #tpu.dot_dimension_numbers<[2], [2], [1], [1], [0, 0, 0, 1, 1, 1], [0], [0]>} : vector<2x8x8xf32>, vector<2x8x8xf32>, vector<2x8x8xf32> -> vector<2x8x8xf32>
    "tpu.trace_stop"() : () -> ()
    %cst_30 = arith.constant dense<0xFF800000> : vector<2x8xf32>
    %90 = vector.multi_reduction <maximumf>, %89, %cst_30 [2] : vector<2x8x8xf32> to vector<2x8xf32>
    %91 = vector.shape_cast %90 : vector<2x8xf32> to vector<2x8x1xf32>
    %92 = vector.broadcast %91 : vector<2x8x1xf32> to vector<2x8x8xf32>
    %93 = arith.subf %89, %92 : vector<2x8x8xf32>
    %94 = math.exp %93 : vector<2x8x8xf32>
    %cst_31 = arith.constant dense<0.000000e+00> : vector<2x8xf32>
    %95 = vector.multi_reduction <add>, %94, %cst_31 [2] : vector<2x8x8xf32> to vector<2x8xf32>
    %96 = vector.shape_cast %95 : vector<2x8xf32> to vector<2x8x1xf32>
    %97 = tpu.reciprocal %96 {approx = true} : vector<2x8x1xf32> -> vector<2x8x1xf32>
    %98 = vector.broadcast %97 : vector<2x8x1xf32> to vector<2x8x8xf32>
    %99 = arith.mulf %94, %98 : vector<2x8x8xf32>
    "tpu.trace_start"() <{level = 10 : i32, message = "bnm,bmd->bnd"}> : () -> ()
    %cst_32 = arith.constant dense<0.000000e+00> : vector<2x8x8xf32>
    %100 = tpu.matmul %99, %88, %cst_32 {dimension_numbers = #tpu.dot_dimension_numbers<[2], [1], [1], [2], [0, 0, 0, 1, 1, 2], [0], [0]>} : vector<2x8x8xf32>, vector<2x8x8xf32>, vector<2x8x8xf32> -> vector<2x8x8xf32>
    "tpu.trace_stop"() : () -> ()
    %101 = tpu.concatenate %55, %70, %85, %100 in 2 : vector<2x8x8xf32>, vector<2x8x8xf32>, vector<2x8x8xf32>, vector<2x8x8xf32> -> vector<2x8x32xf32>
    %102 = vector.shape_cast %101 : vector<2x8x32xf32> to vector<16x32xf32>
    %c0_33 = arith.constant 0 : index
    %c0_34 = arith.constant 0 : index
    %c0_35 = arith.constant 0 : index
    %103 = vector.load %arg6[%c0_33, %c0_34, %c0_35] : memref<1x32x32xf32, #tpu.memory_space<vmem>>, vector<1x32x32xf32>
    %104 = vector.shape_cast %103 : vector<1x32x32xf32> to vector<32x32xf32>
    %cst_36 = arith.constant dense<0.000000e+00> : vector<16x32xf32>
    %105 = tpu.matmul %102, %104, %cst_36 {dimension_numbers = #tpu.dot_dimension_numbers<[1], [0], [0], [1], [0, 0, 1, 1], [], []>} : vector<16x32xf32>, vector<32x32xf32>, vector<16x32xf32> -> vector<16x32xf32>
    %c0_37 = arith.constant 0 : index
    %c0_38 = arith.constant 0 : index
    %c0_39 = arith.constant 0 : index
    %106 = vector.load %arg7[%c0_37, %c0_38, %c0_39] : memref<1x1x32xf32, #tpu.memory_space<vmem>>, vector<1x1x32xf32>
    %107 = vector.shape_cast %106 : vector<1x1x32xf32> to vector<1x32xf32>
    %108 = vector.broadcast %107 : vector<1x32xf32> to vector<16x32xf32>
    %109 = arith.addf %105, %108 : vector<16x32xf32>
    %110 = arith.addf %3, %109 : vector<16x32xf32>
    %c0_40 = arith.constant 0 : index
    %c0_41 = arith.constant 0 : index
    %c0_42 = arith.constant 0 : index
    %111 = vector.load %arg8[%c0_40, %c0_41, %c0_42] : memref<1x1x32xf32, #tpu.memory_space<vmem>>, vector<1x1x32xf32>
    %112 = vector.shape_cast %111 : vector<1x1x32xf32> to vector<1x32xf32>
    %c0_43 = arith.constant 0 : index
    %c0_44 = arith.constant 0 : index
    %c0_45 = arith.constant 0 : index
    %113 = vector.load %arg9[%c0_43, %c0_44, %c0_45] : memref<1x1x32xf32, #tpu.memory_space<vmem>>, vector<1x1x32xf32>
    %114 = vector.shape_cast %113 : vector<1x1x32xf32> to vector<1x32xf32>
    %cst_46 = arith.constant dense<0.000000e+00> : vector<16xf32>
    %115 = vector.multi_reduction <add>, %110, %cst_46 [1] : vector<16x32xf32> to vector<16xf32>
    %116 = vector.shape_cast %115 : vector<16xf32> to vector<16x1xf32>
    %cst_47 = arith.constant 3.200000e+01 : f32
    %117 = vector.broadcast %cst_47 : f32 to vector<16x1xf32>
    %118 = arith.divf %116, %117 : vector<16x1xf32>
    %119 = vector.broadcast %118 : vector<16x1xf32> to vector<16x32xf32>
    %120 = arith.subf %110, %119 : vector<16x32xf32>
    %121 = arith.mulf %120, %120 : vector<16x32xf32>
    %cst_48 = arith.constant dense<0.000000e+00> : vector<16xf32>
    %122 = vector.multi_reduction <add>, %121, %cst_48 [1] : vector<16x32xf32> to vector<16xf32>
    %123 = vector.shape_cast %122 : vector<16xf32> to vector<16x1xf32>
    %cst_49 = arith.constant 3.200000e+01 : f32
    %124 = vector.broadcast %cst_49 : f32 to vector<16x1xf32>
    %125 = arith.divf %123, %124 : vector<16x1xf32>
    %126 = vector.broadcast %118 : vector<16x1xf32> to vector<16x32xf32>
    %127 = arith.subf %110, %126 : vector<16x32xf32>
    %cst_50 = arith.constant 9.99999974E-6 : f32
    %128 = vector.broadcast %cst_50 : f32 to vector<16x1xf32>
    %129 = arith.addf %125, %128 : vector<16x1xf32>
    %130 = math.rsqrt %129 : vector<16x1xf32>
    %131 = vector.broadcast %130 : vector<16x1xf32> to vector<16x32xf32>
    %132 = arith.mulf %127, %131 : vector<16x32xf32>
    %133 = vector.broadcast %112 : vector<1x32xf32> to vector<16x32xf32>
    %134 = arith.mulf %132, %133 : vector<16x32xf32>
    %135 = vector.broadcast %114 : vector<1x32xf32> to vector<16x32xf32>
    %136 = arith.addf %134, %135 : vector<16x32xf32>
    %c0_51 = arith.constant 0 : index
    %c0_52 = arith.constant 0 : index
    %c0_53 = arith.constant 0 : index
    %137 = vector.load %arg10[%c0_51, %c0_52, %c0_53] : memref<1x32x64xf32, #tpu.memory_space<vmem>>, vector<1x32x64xf32>
    %138 = vector.shape_cast %137 : vector<1x32x64xf32> to vector<32x64xf32>
    %cst_54 = arith.constant dense<0.000000e+00> : vector<16x64xf32>
    %139 = tpu.matmul %136, %138, %cst_54 {dimension_numbers = #tpu.dot_dimension_numbers<[1], [0], [0], [1], [0, 0, 1, 1], [], []>} : vector<16x32xf32>, vector<32x64xf32>, vector<16x64xf32> -> vector<16x64xf32>
    %c0_55 = arith.constant 0 : index
    %c0_56 = arith.constant 0 : index
    %c0_57 = arith.constant 0 : index
    %140 = vector.load %arg11[%c0_55, %c0_56, %c0_57] : memref<1x1x64xf32, #tpu.memory_space<vmem>>, vector<1x1x64xf32>
    %141 = vector.shape_cast %140 : vector<1x1x64xf32> to vector<1x64xf32>
    %142 = vector.broadcast %141 : vector<1x64xf32> to vector<16x64xf32>
    %143 = arith.addf %139, %142 : vector<16x64xf32>
    %cst_58 = arith.constant 5.000000e-01 : f32
    %144 = vector.broadcast %cst_58 : f32 to vector<16x64xf32>
    %145 = arith.mulf %144, %143 : vector<16x64xf32>
    %cst_59 = arith.constant 4.471500e-02 : f32
    %146 = vector.broadcast %cst_59 : f32 to vector<16x64xf32>
    %147 = arith.mulf %146, %143 : vector<16x64xf32>
    %148 = arith.mulf %147, %143 : vector<16x64xf32>
    %149 = arith.mulf %148, %143 : vector<16x64xf32>
    %150 = arith.addf %143, %149 : vector<16x64xf32>
    %cst_60 = arith.constant 0.797884583 : f32
    %151 = vector.broadcast %cst_60 : f32 to vector<16x64xf32>
    %152 = arith.mulf %151, %150 : vector<16x64xf32>
    %153 = math.tanh %152 : vector<16x64xf32>
    %cst_61 = arith.constant 1.000000e+00 : f32
    %154 = vector.broadcast %cst_61 : f32 to vector<16x64xf32>
    %155 = arith.addf %154, %153 : vector<16x64xf32>
    %156 = arith.mulf %145, %155 : vector<16x64xf32>
    %c0_62 = arith.constant 0 : index
    %c0_63 = arith.constant 0 : index
    %c0_64 = arith.constant 0 : index
    %157 = vector.load %arg12[%c0_62, %c0_63, %c0_64] : memref<1x64x32xf32, #tpu.memory_space<vmem>>, vector<1x64x32xf32>
    %158 = vector.shape_cast %157 : vector<1x64x32xf32> to vector<64x32xf32>
    %cst_65 = arith.constant dense<0.000000e+00> : vector<16x32xf32>
    %159 = tpu.matmul %156, %158, %cst_65 {dimension_numbers = #tpu.dot_dimension_numbers<[1], [0], [0], [1], [0, 0, 1, 1], [], []>} : vector<16x64xf32>, vector<64x32xf32>, vector<16x32xf32> -> vector<16x32xf32>
    %c0_66 = arith.constant 0 : index
    %c0_67 = arith.constant 0 : index
    %c0_68 = arith.constant 0 : index
    %160 = vector.load %arg13[%c0_66, %c0_67, %c0_68] : memref<1x1x32xf32, #tpu.memory_space<vmem>>, vector<1x1x32xf32>
    %161 = vector.shape_cast %160 : vector<1x1x32xf32> to vector<1x32xf32>
    %162 = vector.broadcast %161 : vector<1x32xf32> to vector<16x32xf32>
    %163 = arith.addf %159, %162 : vector<16x32xf32>
    %164 = arith.addf %110, %163 : vector<16x32xf32>
    %c0_69 = arith.constant 0 : index
    %c0_70 = arith.constant 0 : index
    %165 = vector.load %arg15[%c0_69, %c0_70] : memref<16x32xf32, #tpu.memory_space<vmem>>, vector<16x32xf32>
    tpu.vector_store %arg15[%c0_69, %c0_70], %164 {strides = array<i32>} : memref<16x32xf32, #tpu.memory_space<vmem>>, vector<16x32xf32>,
    %c0_71 = arith.constant 0 : index
    %c0_72 = arith.constant 0 : index
    %166 = vector.load %arg14[%c0_71, %c0_72] : memref<16x32xf32, #tpu.memory_space<vmem>>, vector<16x32xf32>
    tpu.vector_store %arg14[%c0_71, %c0_72], %164 {strides = array<i32>} : memref<16x32xf32, #tpu.memory_space<vmem>>, vector<16x32xf32>,
    return
  }
  func.func @transform_0(%arg0: i32, %arg1: i32) -> (i32, i32) {
    %c0_i32 = arith.constant 0 : i32
    %c0_i32_0 = arith.constant 0 : i32
    return %arg0, %c0_i32 : i32, i32
  }
  func.func @transform_1(%arg0: i32, %arg1: i32) -> (i32, i32, i32) {
    %c0_i32 = arith.constant 0 : i32
    %c0_i32_0 = arith.constant 0 : i32
    %c0_i32_1 = arith.constant 0 : i32
    return %arg1, %c0_i32, %c0_i32_0 : i32, i32, i32
  }
  func.func @transform_2(%arg0: i32, %arg1: i32) -> (i32, i32, i32) {
    %c0_i32 = arith.constant 0 : i32
    %c0_i32_0 = arith.constant 0 : i32
    %c0_i32_1 = arith.constant 0 : i32
    return %arg1, %c0_i32, %c0_i32_0 : i32, i32, i32
  }
  func.func @transform_3(%arg0: i32, %arg1: i32) -> (i32, i32, i32) {
    %c0_i32 = arith.constant 0 : i32
    %c0_i32_0 = arith.constant 0 : i32
    %c0_i32_1 = arith.constant 0 : i32
    return %arg1, %c0_i32, %c0_i32_0 : i32, i32, i32
  }
  func.func @transform_4(%arg0: i32, %arg1: i32) -> (i32, i32, i32) {
    %c0_i32 = arith.constant 0 : i32
    %c0_i32_0 = arith.constant 0 : i32
    %c0_i32_1 = arith.constant 0 : i32
    return %arg1, %c0_i32, %c0_i32_0 : i32, i32, i32
  }
  func.func @transform_5(%arg0: i32, %arg1: i32) -> (i32, i32, i32) {
    %c0_i32 = arith.constant 0 : i32
    %c0_i32_0 = arith.constant 0 : i32
    %c0_i32_1 = arith.constant 0 : i32
    return %arg1, %c0_i32, %c0_i32_0 : i32, i32, i32
  }
  func.func @transform_6(%arg0: i32, %arg1: i32) -> (i32, i32, i32) {
    %c0_i32 = arith.constant 0 : i32
    %c0_i32_0 = arith.constant 0 : i32
    %c0_i32_1 = arith.constant 0 : i32
    return %arg1, %c0_i32, %c0_i32_0 : i32, i32, i32
  }
  func.func @transform_7(%arg0: i32, %arg1: i32) -> (i32, i32, i32) {
    %c0_i32 = arith.constant 0 : i32
    %c0_i32_0 = arith.constant 0 : i32
    %c0_i32_1 = arith.constant 0 : i32
    return %arg1, %c0_i32, %c0_i32_0 : i32, i32, i32
  }
  func.func @transform_8(%arg0: i32, %arg1: i32) -> (i32, i32, i32) {
    %c0_i32 = arith.constant 0 : i32
    %c0_i32_0 = arith.constant 0 : i32
    %c0_i32_1 = arith.constant 0 : i32
    return %arg1, %c0_i32, %c0_i32_0 : i32, i32, i32
  }
  func.func @transform_9(%arg0: i32, %arg1: i32) -> (i32, i32, i32) {
    %c0_i32 = arith.constant 0 : i32
    %c0_i32_0 = arith.constant 0 : i32
    %c0_i32_1 = arith.constant 0 : i32
    return %arg1, %c0_i32, %c0_i32_0 : i32, i32, i32
  }
  func.func @transform_10(%arg0: i32, %arg1: i32) -> (i32, i32, i32) {
    %c0_i32 = arith.constant 0 : i32
    %c0_i32_0 = arith.constant 0 : i32
    %c0_i32_1 = arith.constant 0 : i32
    return %arg1, %c0_i32, %c0_i32_0 : i32, i32, i32
  }
  func.func @transform_11(%arg0: i32, %arg1: i32) -> (i32, i32, i32) {
    %c0_i32 = arith.constant 0 : i32
    %c0_i32_0 = arith.constant 0 : i32
    %c0_i32_1 = arith.constant 0 : i32
    return %arg1, %c0_i32, %c0_i32_0 : i32, i32, i32
  }
  func.func @transform_12(%arg0: i32, %arg1: i32) -> (i32, i32) {
    %c0_i32 = arith.constant 0 : i32
    %c0_i32_0 = arith.constant 0 : i32
    return %arg0, %c0_i32 : i32, i32
  }
}

</mosaic_0001>

<llo_original>
// kernel: temporal_transformer_all.1
$region0: #{temporal_transformer_all.1}
  #allocation0 [shape = 'u32[]', space=smem, size = 0x4, offset = 0x4, fixed_abs, tag = 'smem constant byte address 0x4 - core index']
  #allocation1 [shape = 'u32[144,128]{1,0:T(1,128)}', space=vmem, size = 0x12000, scoped, tag = 'internal scratch']
  #allocation2 [shape = 'f32[16,32]{1,0:T(8,128)}', space=vmem, size = 0x2000, scoped, tag = 'scratch operand']
  %s0 = inlined_call_operand.vmem [shape: f32[16,32], index: 0, kind: input, shape index: {}]
  %s1 = inlined_call_operand.vmem [shape: f32[2,1,32], index: 1, kind: input, shape index: {}]
  %s2 = inlined_call_operand.vmem [shape: f32[2,1,32], index: 2, kind: input, shape index: {}]
  %s3 = inlined_call_operand.vmem [shape: f32[2,32,96], index: 3, kind: input, shape index: {}]
  %s4 = inlined_call_operand.vmem [shape: f32[2,32,32], index: 4, kind: input, shape index: {}]
  %s5 = inlined_call_operand.vmem [shape: f32[2,1,32], index: 5, kind: input, shape index: {}]
  %s6 = inlined_call_operand.vmem [shape: f32[2,1,32], index: 6, kind: input, shape index: {}]
  %s7 = inlined_call_operand.vmem [shape: f32[2,1,32], index: 7, kind: input, shape index: {}]
  %s8 = inlined_call_operand.vmem [shape: f32[2,32,64], index: 8, kind: input, shape index: {}]
  %s9 = inlined_call_operand.vmem [shape: f32[2,1,64], index: 9, kind: input, shape index: {}]
  %s10 = inlined_call_operand.vmem [shape: f32[2,64,32], index: 10, kind: input, shape index: {}]
  %s11 = inlined_call_operand.vmem [shape: f32[2,1,32], index: 11, kind: input, shape index: {}]
  %s12 = inlined_call_operand.hbm [shape: f32[16,32], index: 12, kind: output, shape index: {}]
  %s13 = sld [smem:[#allocation0]]
  $region85: #{temporal_transformer_all.1} parent=0
    _
  %s15 = ssub.s32 1, %s13
  %s16 = scalar_select 0, %s15, %s13
  $region1: #{temporal_transformer_all.1} parent=0
    #allocation3 [shape = 'u8[8192]{0}', space=vmem, size = 0x2000, scoped, tag = 'output window, operand 0, single buffered']
    #allocation4 [shape = 's32[2]{0}', space=sflag, size = 0x8, scoped, tag = 'scoped memory for temporal_transformer_all.1']
    %17 = vsyncpa [#allocation4], 0
    loop: start=0, step=1, limit=4
    $region2: #{temporal_transformer_all.1} parent=1 // loop_pre_header
      _
    $region3: #{temporal_transformer_all.1} parent=1 // loop_header
      %s19 = sphi 0, %s23
      %p20 = scmp.ge.s32.totalorder %s19, 4
      %s26 = sphi 0, %s38
      %s27 = sphi 0, %s34
      %s28 = sphi 0, %s26
      %s29 = sphi 0, %s27
      %s30 = sphi 0, %s28
      %s31 = sphi 0, %s29
      %s41 = sphi 0, %s43
      %s44 = sphi 0, %s41
      %s45 = sphi 0, %s44
      %s61 = sphi 0, %s45
      %s67 = sphi 0, %s69
      %s70 = sphi 0, %s67
      %s71 = sphi 0, %s70
      %s87 = sphi 0, %s71
      %s93 = sphi 0, %s95
      %s96 = sphi 0, %s93
      %s97 = sphi 0, %s96
      %s113 = sphi 0, %s97
      %s119 = sphi 0, %s121
      %s122 = sphi 0, %s119
      %s123 = sphi 0, %s122
      %s139 = sphi 0, %s123
      %s145 = sphi 0, %s147
      %s148 = sphi 0, %s145
      %s149 = sphi 0, %s148
      %s165 = sphi 0, %s149
      %s171 = sphi 0, %s173
      %s174 = sphi 0, %s171
      %s175 = sphi 0, %s174
      %s191 = sphi 0, %s175
      %s197 = sphi 0, %s199
      %s200 = sphi 0, %s197
      %s201 = sphi 0, %s200
      %s217 = sphi 0, %s201
      %s223 = sphi 0, %s225
      %s226 = sphi 0, %s223
      %s227 = sphi 0, %s226
      %s243 = sphi 0, %s227
      %s249 = sphi 0, %s251
      %s252 = sphi 0, %s249
      %s253 = sphi 0, %s252
      %s269 = sphi 0, %s253
      %s275 = sphi 0, %s277
      %s278 = sphi 0, %s275
      %s279 = sphi 0, %s278
      %s295 = sphi 0, %s279
      %s301 = sphi 0, %s303
      %s304 = sphi 0, %s301
      %s305 = sphi 0, %s304
      %s321 = sphi 0, %s305
      %s327 = sphi 0, %s329
      %s330 = sphi 0, %s327
      %s331 = sphi 0, %s330
      %s347 = sphi 0, %s331
      %s353 = sphi 0, %s355
      %s356 = sphi 0, %s353
      %s357 = sphi 0, %s356
      %s373 = sphi 0, %s357
    $region4: #{temporal_transformer_all.1} parent=1 // loop_header_branch
      %22 = sbr.rel (%p20) target = $region8
    $region5: #{temporal_transformer_all.1} parent=1 // loop_body
      %s24 = ssub.s32 %s19, 1
      %s25 = ssub.s32 %s19, 2
      %s32 = sadd.s32 1, %s27
      %p33 = scmp.ge.s32.totalorder %s32, 2
      %s34 = scalar_select %p33, 0, %s32
      %s35 = sadd.s32 1, %s26
      %s36 = scalar_select %p33, %s35, %s26
      %p37 = scmp.ge.s32.totalorder %s36, 1
      %s38 = scalar_select %p37, 0, %s36
      %s39 = ssub.s32 %s26, %s38
      %p40 = scmp.eq.s32.totalorder %s39, 0
      %s42 = sadd.s32 %s41, 1
      %s43 = scalar_select %p40, %s41, %s42
      %p46 = pneg %p40
      %p47 = scmp.eq.s32.totalorder %s19, 1
      %p48 = por %p46, %p47
      %p49 = scmp.ne.s32.totalorder %s41, %s44
      %p50 = scmp.eq.s32.totalorder %s19, 0
      %p51 = por %p49, %p50
      %p52 = scmp.ne.s32.totalorder %s41, %s44
      %p53 = scmp.eq.s32.totalorder %s24, 1
      %p54 = por %p52, %p53
      %p55 = scmp.ne.s32.totalorder %s44, %s45
      %p56 = scmp.eq.s32.totalorder %s24, 0
      %p57 = por %p55, %p56
      %p58 = scmp.ne.s32.totalorder %s44, %s45
      %p59 = scmp.eq.s32.totalorder %s25, 1
      %p60 = por %p58, %p59
      %p62 = scmp.ne.s32.totalorder %s45, %s61
      %p63 = scmp.eq.s32.totalorder %s25, 0
      %p64 = por %p62, %p63
      %s65 = ssub.s32 %s27, %s34
      %p66 = scmp.eq.s32.totalorder %s65, 0
      %s68 = sadd.s32 %s67, 1
      %s69 = scalar_select %p66, %s67, %s68
      %p72 = pneg %p66
      %p73 = scmp.eq.s32.totalorder %s19, 1
      %p74 = por %p72, %p73
      %p75 = scmp.ne.s32.totalorder %s67, %s70
      %p76 = scmp.eq.s32.totalorder %s19, 0
      %p77 = por %p75, %p76
      %p78 = scmp.ne.s32.totalorder %s67, %s70
      %p79 = scmp.eq.s32.totalorder %s24, 1
      %p80 = por %p78, %p79
      %p81 = scmp.ne.s32.totalorder %s70, %s71
      %p82 = scmp.eq.s32.totalorder %s24, 0
      %p83 = por %p81, %p82
      %p84 = scmp.ne.s32.totalorder %s70, %s71
      %p85 = scmp.eq.s32.totalorder %s25, 1
      %p86 = por %p84, %p85
      %p88 = scmp.ne.s32.totalorder %s71, %s87
      %p89 = scmp.eq.s32.totalorder %s25, 0
      %p90 = por %p88, %p89
      %s91 = ssub.s32 %s27, %s34
      %p92 = scmp.eq.s32.totalorder %s91, 0
      %s94 = sadd.s32 %s93, 1
      %s95 = scalar_select %p92, %s93, %s94
      %p98 = pneg %p92
      %p99 = scmp.eq.s32.totalorder %s19, 1
      %p100 = por %p98, %p99
      %p101 = scmp.ne.s32.totalorder %s93, %s96
      %p102 = scmp.eq.s32.totalorder %s19, 0
      %p103 = por %p101, %p102
      %p104 = scmp.ne.s32.totalorder %s93, %s96
      %p105 = scmp.eq.s32.totalorder %s24, 1
      %p106 = por %p104, %p105
      %p107 = scmp.ne.s32.totalorder %s96, %s97
      %p108 = scmp.eq.s32.totalorder %s24, 0
      %p109 = por %p107, %p108
      %p110 = scmp.ne.s32.totalorder %s96, %s97
      %p111 = scmp.eq.s32.totalorder %s25, 1
      %p112 = por %p110, %p111
      %p114 = scmp.ne.s32.totalorder %s97, %s113
      %p115 = scmp.eq.s32.totalorder %s25, 0
      %p116 = por %p114, %p115
      %s117 = ssub.s32 %s27, %s34
      %p118 = scmp.eq.s32.totalorder %s117, 0
      %s120 = sadd.s32 %s119, 1
      %s121 = scalar_select %p118, %s119, %s120
      %p124 = pneg %p118
      %p125 = scmp.eq.s32.totalorder %s19, 1
      %p126 = por %p124, %p125
      %p127 = scmp.ne.s32.totalorder %s119, %s122
      %p128 = scmp.eq.s32.totalorder %s19, 0
      %p129 = por %p127, %p128
      %p130 = scmp.ne.s32.totalorder %s119, %s122
      %p131 = scmp.eq.s32.totalorder %s24, 1
      %p132 = por %p130, %p131
      %p133 = scmp.ne.s32.totalorder %s122, %s123
      %p134 = scmp.eq.s32.totalorder %s24, 0
      %p135 = por %p133, %p134
      %p136 = scmp.ne.s32.totalorder %s122, %s123
      %p137 = scmp.eq.s32.totalorder %s25, 1
      %p138 = por %p136, %p137
      %p140 = scmp.ne.s32.totalorder %s123, %s139
      %p141 = scmp.eq.s32.totalorder %s25, 0
      %p142 = por %p140, %p141
      %s143 = ssub.s32 %s27, %s34
      %p144 = scmp.eq.s32.totalorder %s143, 0
      %s146 = sadd.s32 %s145, 1
      %s147 = scalar_select %p144, %s145, %s146
      %p150 = pneg %p144
      %p151 = scmp.eq.s32.totalorder %s19, 1
      %p152 = por %p150, %p151
      %p153 = scmp.ne.s32.totalorder %s145, %s148
      %p154 = scmp.eq.s32.totalorder %s19, 0
      %p155 = por %p153, %p154
      %p156 = scmp.ne.s32.totalorder %s145, %s148
      %p157 = scmp.eq.s32.totalorder %s24, 1
      %p158 = por %p156, %p157
      %p159 = scmp.ne.s32.totalorder %s148, %s149
      %p160 = scmp.eq.s32.totalorder %s24, 0
      %p161 = por %p159, %p160
      %p162 = scmp.ne.s32.totalorder %s148, %s149
      %p163 = scmp.eq.s32.totalorder %s25, 1
      %p164 = por %p162, %p163
      %p166 = scmp.ne.s32.totalorder %s149, %s165
      %p167 = scmp.eq.s32.totalorder %s25, 0
      %p168 = por %p166, %p167
      %s169 = ssub.s32 %s27, %s34
      %p170 = scmp.eq.s32.totalorder %s169, 0
      %s172 = sadd.s32 %s171, 1
      %s173 = scalar_select %p170, %s171, %s172
      %p176 = pneg %p170
      %p177 = scmp.eq.s32.totalorder %s19, 1
      %p178 = por %p176, %p177
      %p179 = scmp.ne.s32.totalorder %s171, %s174
      %p180 = scmp.eq.s32.totalorder %s19, 0
      %p181 = por %p179, %p180
      %p182 = scmp.ne.s32.totalorder %s171, %s174
      %p183 = scmp.eq.s32.totalorder %s24, 1
      %p184 = por %p182, %p183
      %p185 = scmp.ne.s32.totalorder %s174, %s175
      %p186 = scmp.eq.s32.totalorder %s24, 0
      %p187 = por %p185, %p186
      %p188 = scmp.ne.s32.totalorder %s174, %s175
      %p189 = scmp.eq.s32.totalorder %s25, 1
      %p190 = por %p188, %p189
      %p192 = scmp.ne.s32.totalorder %s175, %s191
      %p193 = scmp.eq.s32.totalorder %s25, 0
      %p194 = por %p192, %p193
      %s195 = ssub.s32 %s27, %s34
      %p196 = scmp.eq.s32.totalorder %s195, 0
      %s198 = sadd.s32 %s197, 1
      %s199 = scalar_select %p196, %s197, %s198
      %p202 = pneg %p196
      %p203 = scmp.eq.s32.totalorder %s19, 1
      %p204 = por %p202, %p203
      %p205 = scmp.ne.s32.totalorder %s197, %s200
      %p206 = scmp.eq.s32.totalorder %s19, 0
      %p207 = por %p205, %p206
      %p208 = scmp.ne.s32.totalorder %s197, %s200
      %p209 = scmp.eq.s32.totalorder %s24, 1
      %p210 = por %p208, %p209
      %p211 = scmp.ne.s32.totalorder %s200, %s201
      %p212 = scmp.eq.s32.totalorder %s24, 0
      %p213 = por %p211, %p212
      %p214 = scmp.ne.s32.totalorder %s200, %s201
      %p215 = scmp.eq.s32.totalorder %s25, 1
      %p216 = por %p214, %p215
      %p218 = scmp.ne.s32.totalorder %s201, %s217
      %p219 = scmp.eq.s32.totalorder %s25, 0
      %p220 = por %p218, %p219
      %s221 = ssub.s32 %s27, %s34
      %p222 = scmp.eq.s32.totalorder %s221, 0
      %s224 = sadd.s32 %s223, 1
      %s225 = scalar_select %p222, %s223, %s224
      %p228 = pneg %p222
      %p229 = scmp.eq.s32.totalorder %s19, 1
      %p230 = por %p228, %p229
      %p231 = scmp.ne.s32.totalorder %s223, %s226
      %p232 = scmp.eq.s32.totalorder %s19, 0
      %p233 = por %p231, %p232
      %p234 = scmp.ne.s32.totalorder %s223, %s226
      %p235 = scmp.eq.s32.totalorder %s24, 1
      %p236 = por %p234, %p235
      %p237 = scmp.ne.s32.totalorder %s226, %s227
      %p238 = scmp.eq.s32.totalorder %s24, 0
      %p239 = por %p237, %p238
      %p240 = scmp.ne.s32.totalorder %s226, %s227
      %p241 = scmp.eq.s32.totalorder %s25, 1
      %p242 = por %p240, %p241
      %p244 = scmp.ne.s32.totalorder %s227, %s243
      %p245 = scmp.eq.s32.totalorder %s25, 0
      %p246 = por %p244, %p245
      %s247 = ssub.s32 %s27, %s34
      %p248 = scmp.eq.s32.totalorder %s247, 0
      %s250 = sadd.s32 %s249, 1
      %s251 = scalar_select %p248, %s249, %s250
      %p254 = pneg %p248
      %p255 = scmp.eq.s32.totalorder %s19, 1
      %p256 = por %p254, %p255
      %p257 = scmp.ne.s32.totalorder %s249, %s252
      %p258 = scmp.eq.s32.totalorder %s19, 0
      %p259 = por %p257, %p258
      %p260 = scmp.ne.s32.totalorder %s249, %s252
      %p261 = scmp.eq.s32.totalorder %s24, 1
      %p262 = por %p260, %p261
      %p263 = scmp.ne.s32.totalorder %s252, %s253
      %p264 = scmp.eq.s32.totalorder %s24, 0
      %p265 = por %p263, %p264
      %p266 = scmp.ne.s32.totalorder %s252, %s253
      %p267 = scmp.eq.s32.totalorder %s25, 1
      %p268 = por %p266, %p267
      %p270 = scmp.ne.s32.totalorder %s253, %s269
      %p271 = scmp.eq.s32.totalorder %s25, 0
      %p272 = por %p270, %p271
      %s273 = ssub.s32 %s27, %s34
      %p274 = scmp.eq.s32.totalorder %s273, 0
      %s276 = sadd.s32 %s275, 1
      %s277 = scalar_select %p274, %s275, %s276
      %p280 = pneg %p274
      %p281 = scmp.eq.s32.totalorder %s19, 1
      %p282 = por %p280, %p281
      %p283 = scmp.ne.s32.totalorder %s275, %s278
      %p284 = scmp.eq.s32.totalorder %s19, 0
      %p285 = por %p283, %p284
      %p286 = scmp.ne.s32.totalorder %s275, %s278
      %p287 = scmp.eq.s32.totalorder %s24, 1
      %p288 = por %p286, %p287
      %p289 = scmp.ne.s32.totalorder %s278, %s279
      %p290 = scmp.eq.s32.totalorder %s24, 0
      %p291 = por %p289, %p290
      %p292 = scmp.ne.s32.totalorder %s278, %s279
      %p293 = scmp.eq.s32.totalorder %s25, 1
      %p294 = por %p292, %p293
      %p296 = scmp.ne.s32.totalorder %s279, %s295
      %p297 = scmp.eq.s32.totalorder %s25, 0
      %p298 = por %p296, %p297
      %s299 = ssub.s32 %s27, %s34
      %p300 = scmp.eq.s32.totalorder %s299, 0
      %s302 = sadd.s32 %s301, 1
      %s303 = scalar_select %p300, %s301, %s302
      %p306 = pneg %p300
      %p307 = scmp.eq.s32.totalorder %s19, 1
      %p308 = por %p306, %p307
      %p309 = scmp.ne.s32.totalorder %s301, %s304
      %p310 = scmp.eq.s32.totalorder %s19, 0
      %p311 = por %p309, %p310
      %p312 = scmp.ne.s32.totalorder %s301, %s304
      %p313 = scmp.eq.s32.totalorder %s24, 1
      %p314 = por %p312, %p313
      %p315 = scmp.ne.s32.totalorder %s304, %s305
      %p316 = scmp.eq.s32.totalorder %s24, 0
      %p317 = por %p315, %p316
      %p318 = scmp.ne.s32.totalorder %s304, %s305
      %p319 = scmp.eq.s32.totalorder %s25, 1
      %p320 = por %p318, %p319
      %p322 = scmp.ne.s32.totalorder %s305, %s321
      %p323 = scmp.eq.s32.totalorder %s25, 0
      %p324 = por %p322, %p323
      %s325 = ssub.s32 %s27, %s34
      %p326 = scmp.eq.s32.totalorder %s325, 0
      %s328 = sadd.s32 %s327, 1
      %s329 = scalar_select %p326, %s327, %s328
      %p332 = pneg %p326
      %p333 = scmp.eq.s32.totalorder %s19, 1
      %p334 = por %p332, %p333
      %p335 = scmp.ne.s32.totalorder %s327, %s330
      %p336 = scmp.eq.s32.totalorder %s19, 0
      %p337 = por %p335, %p336
      %p338 = scmp.ne.s32.totalorder %s327, %s330
      %p339 = scmp.eq.s32.totalorder %s24, 1
      %p340 = por %p338, %p339
      %p341 = scmp.ne.s32.totalorder %s330, %s331
      %p342 = scmp.eq.s32.totalorder %s24, 0
      %p343 = por %p341, %p342
      %p344 = scmp.ne.s32.totalorder %s330, %s331
      %p345 = scmp.eq.s32.totalorder %s25, 1
      %p346 = por %p344, %p345
      %p348 = scmp.ne.s32.totalorder %s331, %s347
      %p349 = scmp.eq.s32.totalorder %s25, 0
      %p350 = por %p348, %p349
      %s351 = ssub.s32 %s26, %s38
      %p352 = scmp.eq.s32.totalorder %s351, 0
      %s354 = sadd.s32 %s353, 1
      %s355 = scalar_select %p352, %s353, %s354
      %p358 = pneg %p352
      %p359 = scmp.eq.s32.totalorder %s19, 1
      %p360 = por %p358, %p359
      %p361 = scmp.ne.s32.totalorder %s353, %s356
      %p362 = scmp.eq.s32.totalorder %s19, 0
      %p363 = por %p361, %p362
      %p364 = scmp.ne.s32.totalorder %s353, %s356
      %p365 = scmp.eq.s32.totalorder %s24, 1
      %p366 = por %p364, %p365
      %p367 = scmp.ne.s32.totalorder %s356, %s357
      %p368 = scmp.eq.s32.totalorder %s24, 0
      %p369 = por %p367, %p368
      %p370 = scmp.ne.s32.totalorder %s356, %s357
      %p371 = scmp.eq.s32.totalorder %s25, 1
      %p372 = por %p370, %p371
      %p374 = scmp.ne.s32.totalorder %s357, %s373
      %p375 = scmp.eq.s32.totalorder %s25, 0
      %p376 = por %p374, %p375
      %p377 = scmp.le.s32.totalorder 1, %s19
      %p378 = scmp.lt.s32.totalorder %s19, 3
      %p379 = pnand %p377, %p378
      %p380 = pneg %p379
      // Predicated region
      $region9: #{temporal_transformer_all.1} parent=5 // pred_check
        _
      $region10: #{temporal_transformer_all.1} parent=5 // pred_check_branch
        %382 = sbr.rel (%p379) target = $region12
      $region11: #{temporal_transformer_all.1} parent=5 // pred_region
        %s383 = ssub.s32 %s19, 1
        // Predicated region
        $region13: #{temporal_transformer_all.1} parent=11 // pred_check
          %p384 = pneg %p57
        $region14: #{temporal_transformer_all.1} parent=11 // pred_check_branch
          %386 = sbr.rel (%p384) target = $region16
        $region15: #{temporal_transformer_all.1} parent=11 // pred_region
          %s387 = smul.u32 2, %s28
          %p388 = scmp.lt.s32.totalorder %s387, 1
          %s389 = scalar_select %p388, %s387, 1
          %s390 = smul.addr %s389, 8
          %s391 = scalar_lea.vmem %s0, %s390
          %s392 = smul.u32 2, %s28
        $region16: #{temporal_transformer_all.1} parent=11 // pred_fallthru
          _
      $region12: #{temporal_transformer_all.1} parent=5 // pred_fallthru
        _
      %p393 = scmp.lt.s32.totalorder %s19, 2
      // Predicated region
      $region17: #{temporal_transformer_all.1} parent=5 // pred_check
        %p394 = pneg %p393
      $region18: #{temporal_transformer_all.1} parent=5 // pred_check_branch
        %396 = sbr.rel (%p394) target = $region20
      $region19: #{temporal_transformer_all.1} parent=5 // pred_region
        // Predicated region
        $region21: #{temporal_transformer_all.1} parent=19 // pred_check
          %p397 = pneg %p77
        $region22: #{temporal_transformer_all.1} parent=19 // pred_check_branch
          %399 = sbr.rel (%p397) target = $region24
        $region23: #{temporal_transformer_all.1} parent=19 // pred_region
          %p400 = scmp.lt.s32.totalorder %s27, 1
          %s401 = scalar_select %p400, %s27, 1
          %s402 = scalar_lea.vmem %s1, %s401
        $region24: #{temporal_transformer_all.1} parent=19 // pred_fallthru
          _
        // Predicated region
        $region25: #{temporal_transformer_all.1} parent=19 // pred_check
          %p403 = pneg %p103
        $region26: #{temporal_transformer_all.1} parent=19 // pred_check_branch
          %405 = sbr.rel (%p403) target = $region28
        $region27: #{temporal_transformer_all.1} parent=19 // pred_region
          %p406 = scmp.lt.s32.totalorder %s27, 1
          %s407 = scalar_select %p406, %s27, 1
          %s408 = scalar_lea.vmem %s2, %s407
        $region28: #{temporal_transformer_all.1} parent=19 // pred_fallthru
          _
        // Predicated region
        $region29: #{temporal_transformer_all.1} parent=19 // pred_check
          %p409 = pneg %p129
        $region30: #{temporal_transformer_all.1} parent=19 // pred_check_branch
          %411 = sbr.rel (%p409) target = $region32
        $region31: #{temporal_transformer_all.1} parent=19 // pred_region
          %p412 = scmp.lt.s32.totalorder %s27, 1
          %s413 = scalar_select %p412, %s27, 1
          %s414 = smul.addr %s413, 4
          %s415 = smul.addr %s414, 8
          %s416 = scalar_lea.vmem %s3, %s415
        $region32: #{temporal_transformer_all.1} parent=19 // pred_fallthru
          _
        // Predicated region
        $region33: #{temporal_transformer_all.1} parent=19 // pred_check
          %p417 = pneg %p155
        $region34: #{temporal_transformer_all.1} parent=19 // pred_check_branch
          %419 = sbr.rel (%p417) target = $region36
        $region35: #{temporal_transformer_all.1} parent=19 // pred_region
          %p420 = scmp.lt.s32.totalorder %s27, 1
          %s421 = scalar_select %p420, %s27, 1
          %s422 = smul.addr %s421, 4
          %s423 = smul.addr %s422, 8
          %s424 = scalar_lea.vmem %s4, %s423
        $region36: #{temporal_transformer_all.1} parent=19 // pred_fallthru
          _
        // Predicated region
        $region37: #{temporal_transformer_all.1} parent=19 // pred_check
          %p425 = pneg %p181
        $region38: #{temporal_transformer_all.1} parent=19 // pred_check_branch
          %427 = sbr.rel (%p425) target = $region40
        $region39: #{temporal_transformer_all.1} parent=19 // pred_region
          %p428 = scmp.lt.s32.totalorder %s27, 1
          %s429 = scalar_select %p428, %s27, 1
          %s430 = scalar_lea.vmem %s5, %s429
        $region40: #{temporal_transformer_all.1} parent=19 // pred_fallthru
          _
        // Predicated region
        $region41: #{temporal_transformer_all.1} parent=19 // pred_check
          %p431 = pneg %p207
        $region42: #{temporal_transformer_all.1} parent=19 // pred_check_branch
          %433 = sbr.rel (%p431) target = $region44
        $region43: #{temporal_transformer_all.1} parent=19 // pred_region
          %p434 = scmp.lt.s32.totalorder %s27, 1
          %s435 = scalar_select %p434, %s27, 1
          %s436 = scalar_lea.vmem %s6, %s435
        $region44: #{temporal_transformer_all.1} parent=19 // pred_fallthru
          _
        // Predicated region
        $region45: #{temporal_transformer_all.1} parent=19 // pred_check
          %p437 = pneg %p233
        $region46: #{temporal_transformer_all.1} parent=19 // pred_check_branch
          %439 = sbr.rel (%p437) target = $region48
        $region47: #{temporal_transformer_all.1} parent=19 // pred_region
          %p440 = scmp.lt.s32.totalorder %s27, 1
          %s441 = scalar_select %p440, %s27, 1
          %s442 = scalar_lea.vmem %s7, %s441
        $region48: #{temporal_transformer_all.1} parent=19 // pred_fallthru
          _
        // Predicated region
        $region49: #{temporal_transformer_all.1} parent=19 // pred_check
          %p443 = pneg %p259
        $region50: #{temporal_transformer_all.1} parent=19 // pred_check_branch
          %445 = sbr.rel (%p443) target = $region52
        $region51: #{temporal_transformer_all.1} parent=19 // pred_region
          %p446 = scmp.lt.s32.totalorder %s27, 1
          %s447 = scalar_select %p446, %s27, 1
          %s448 = smul.addr %s447, 4
          %s449 = smul.addr %s448, 8
          %s450 = scalar_lea.vmem %s8, %s449
        $region52: #{temporal_transformer_all.1} parent=19 // pred_fallthru
          _
        // Predicated region
        $region53: #{temporal_transformer_all.1} parent=19 // pred_check
          %p451 = pneg %p285
        $region54: #{temporal_transformer_all.1} parent=19 // pred_check_branch
          %453 = sbr.rel (%p451) target = $region56
        $region55: #{temporal_transformer_all.1} parent=19 // pred_region
          %p454 = scmp.lt.s32.totalorder %s27, 1
          %s455 = scalar_select %p454, %s27, 1
          %s456 = scalar_lea.vmem %s9, %s455
        $region56: #{temporal_transformer_all.1} parent=19 // pred_fallthru
          _
        // Predicated region
        $region57: #{temporal_transformer_all.1} parent=19 // pred_check
          %p457 = pneg %p311
        $region58: #{temporal_transformer_all.1} parent=19 // pred_check_branch
          %459 = sbr.rel (%p457) target = $region60
        $region59: #{temporal_transformer_all.1} parent=19 // pred_region
          %p460 = scmp.lt.s32.totalorder %s27, 1
          %s461 = scalar_select %p460, %s27, 1
          %s462 = smul.addr %s461, 8
          %s463 = smul.addr %s462, 8
          %s464 = scalar_lea.vmem %s10, %s463
        $region60: #{temporal_transformer_all.1} parent=19 // pred_fallthru
          _
        // Predicated region
        $region61: #{temporal_transformer_all.1} parent=19 // pred_check
          %p465 = pneg %p337
        $region62: #{temporal_transformer_all.1} parent=19 // pred_check_branch
          %467 = sbr.rel (%p465) target = $region64
        $region63: #{temporal_transformer_all.1} parent=19 // pred_region
          %p468 = scmp.lt.s32.totalorder %s27, 1
          %s469 = scalar_select %p468, %s27, 1
          %s470 = scalar_lea.vmem %s11, %s469
        $region64: #{temporal_transformer_all.1} parent=19 // pred_fallthru
          _
      $region20: #{temporal_transformer_all.1} parent=5 // pred_fallthru
        _
      %p471 = scmp.le.s32.totalorder 1, %s19
      %p472 = scmp.lt.s32.totalorder %s19, 3
      %p473 = pnand %p471, %p472
      %p474 = pneg %p473
      // Predicated region
      $region65: #{temporal_transformer_all.1} parent=5 // pred_check
        _
      $region66: #{temporal_transformer_all.1} parent=5 // pred_check_branch
        %476 = sbr.rel (%p473) target = $region68
      $region67: #{temporal_transformer_all.1} parent=5 // pred_region
        %s477 = ssub.s32 %s19, 1
        %s478 = smul.u32 2, %s28
        %p479 = scmp.lt.s32.totalorder %s478, 1
        %s480 = scalar_select %p479, %s478, 1
        %s481 = smul.addr %s480, 8
        %s482 = scalar_lea.vmem %s0, %s481
        %p483 = pneg %p57
        %p484 = pneg %p54
        %p485 = scmp.lt.s32.totalorder %s29, 1
        %s486 = scalar_select %p485, %s29, 1
        %s487 = scalar_lea.vmem %s1, %s486
        %p488 = pneg %p83
        %p489 = pneg %p80
        %p490 = scmp.lt.s32.totalorder %s29, 1
        %s491 = scalar_select %p490, %s29, 1
        %s492 = scalar_lea.vmem %s2, %s491
        %p493 = pneg %p109
        %p494 = pneg %p106
        %p495 = scmp.lt.s32.totalorder %s29, 1
        %s496 = scalar_select %p495, %s29, 1
        %s497 = smul.addr %s496, 4
        %s498 = smul.addr %s497, 8
        %s499 = scalar_lea.vmem %s3, %s498
        %p500 = pneg %p135
        %p501 = pneg %p132
        %p502 = scmp.lt.s32.totalorder %s29, 1
        %s503 = scalar_select %p502, %s29, 1
        %s504 = smul.addr %s503, 4
        %s505 = smul.addr %s504, 8
        %s506 = scalar_lea.vmem %s4, %s505
        %p507 = pneg %p161
        %p508 = pneg %p158
        %p509 = scmp.lt.s32.totalorder %s29, 1
        %s510 = scalar_select %p509, %s29, 1
        %s511 = scalar_lea.vmem %s5, %s510
        %p512 = pneg %p187
        %p513 = pneg %p184
        %p514 = scmp.lt.s32.totalorder %s29, 1
        %s515 = scalar_select %p514, %s29, 1
        %s516 = scalar_lea.vmem %s6, %s515
        %p517 = pneg %p213
        %p518 = pneg %p210
        %p519 = scmp.lt.s32.totalorder %s29, 1
        %s520 = scalar_select %p519, %s29, 1
        %s521 = scalar_lea.vmem %s7, %s520
        %p522 = pneg %p239
        %p523 = pneg %p236
        %p524 = scmp.lt.s32.totalorder %s29, 1
        %s525 = scalar_select %p524, %s29, 1
        %s526 = smul.addr %s525, 4
        %s527 = smul.addr %s526, 8
        %s528 = scalar_lea.vmem %s8, %s527
        %p529 = pneg %p265
        %p530 = pneg %p262
        %p531 = scmp.lt.s32.totalorder %s29, 1
        %s532 = scalar_select %p531, %s29, 1
        %s533 = scalar_lea.vmem %s9, %s532
        %p534 = pneg %p291
        %p535 = pneg %p288
        %p536 = scmp.lt.s32.totalorder %s29, 1
        %s537 = scalar_select %p536, %s29, 1
        %s538 = smul.addr %s537, 8
        %s539 = smul.addr %s538, 8
        %s540 = scalar_lea.vmem %s10, %s539
        %p541 = pneg %p317
        %p542 = pneg %p314
        %p543 = scmp.lt.s32.totalorder %s29, 1
        %s544 = scalar_select %p543, %s29, 1
        %s545 = scalar_lea.vmem %s11, %s544
        %p546 = pneg %p343
        %p547 = pneg %p340
        %p548 = pneg %p369
        %p549 = pneg %p366
        %s550 = smul.u32 2, %s28
        %p551 = scmp.lt.s32.totalorder %s550, 1
        %s552 = scalar_select %p551, %s550, 1
        %s553 = smul.addr %s552, 8
        %s554 = scalar_lea.vmem %s0, %s553
        %s555 = smul.u32 2, %s28
        %p556 = scmp.lt.s32.totalorder %s29, 1
        %s557 = scalar_select %p556, %s29, 1
        %s558 = scalar_lea.vmem %s1, %s557
        %p559 = scmp.lt.s32.totalorder %s29, 1
        %s560 = scalar_select %p559, %s29, 1
        %s561 = scalar_lea.vmem %s2, %s560
        %p562 = scmp.lt.s32.totalorder %s29, 1
        %s563 = scalar_select %p562, %s29, 1
        %s564 = smul.addr %s563, 4
        %s565 = smul.addr %s564, 8
        %s566 = scalar_lea.vmem %s3, %s565
        %p567 = scmp.lt.s32.totalorder %s29, 1
        %s568 = scalar_select %p567, %s29, 1
        %s569 = smul.addr %s568, 4
        %s570 = smul.addr %s569, 8
        %s571 = scalar_lea.vmem %s4, %s570
        %p572 = scmp.lt.s32.totalorder %s29, 1
        %s573 = scalar_select %p572, %s29, 1
        %s574 = scalar_lea.vmem %s5, %s573
        %p575 = scmp.lt.s32.totalorder %s29, 1
        %s576 = scalar_select %p575, %s29, 1
        %s577 = scalar_lea.vmem %s6, %s576
        %p578 = scmp.lt.s32.totalorder %s29, 1
        %s579 = scalar_select %p578, %s29, 1
        %s580 = scalar_lea.vmem %s7, %s579
        %p581 = scmp.lt.s32.totalorder %s29, 1
        %s582 = scalar_select %p581, %s29, 1
        %s583 = smul.addr %s582, 4
        %s584 = smul.addr %s583, 8
        %s585 = scalar_lea.vmem %s8, %s584
        %p586 = scmp.lt.s32.totalorder %s29, 1
        %s587 = scalar_select %p586, %s29, 1
        %s588 = scalar_lea.vmem %s9, %s587
        %p589 = scmp.lt.s32.totalorder %s29, 1
        %s590 = scalar_select %p589, %s29, 1
        %s591 = smul.addr %s590, 8
        %s592 = smul.addr %s591, 8
        %s593 = scalar_lea.vmem %s10, %s592
        %p594 = scmp.lt.s32.totalorder %s29, 1
        %s595 = scalar_select %p594, %s29, 1
        %s596 = scalar_lea.vmem %s11, %s595
        %s597 = smul.u32 2, %s28
        %p598 = scmp.eq.s32.totalorder %s29, 0
        // Predicated region
        $region69: #{temporal_transformer_all.1} parent=67 // pred_check
          %p599 = pneg %p598
        $region70: #{temporal_transformer_all.1} parent=67 // pred_check_branch
          %601 = sbr.rel (%p599) target = $region72
        $region71: #{temporal_transformer_all.1} parent=67 // pred_region
          %v602 = vld [vmem:[%s554] sm:$0xff]
          %v603 = vld [vmem:[%s554 + $0x8] sm:$0xff]
          %vm604 = vcmask 261120
          %605 = vst.msk [vmem:[#allocation2] sm:$0xff] %vm604, %v602
          %606 = vst.msk [vmem:[#allocation2 + $0x8] sm:$0xff] %vm604, %v603
        $region72: #{temporal_transformer_all.1} parent=67 // pred_fallthru
          _
        %v607 = vld [vmem:[#allocation2] sm:$0xff]
        %v608 = vld [vmem:[#allocation2 + $0x8] sm:$0xff]
        %v609 = vld [vmem:[%s558] sm:$0x1]
        %v610 = vld [vmem:[%s561] sm:$0x1]
        %vm611 = vcmask 261120
        %v612 = vsel %vm611, %v607, 0.0
        %613 = vadd.xlane.f32.xlu0 %v612
        %v614 = vpop.xlane.xlu0 %613
        %v615 = vsel %vm611, %v608, 0.0
        %616 = vadd.xlane.f32.xlu0 %v615
        %v617 = vpop.xlane.xlu0 %616
        %v618 = vrcp.pop 32.0
        %v619 = vmul.f32 %v614, %v618
        %v620 = vmul.f32 %v617, %v618
        %v621 = vsub.f32 %v607, %v619
        %v622 = vsub.f32 %v608, %v620
        %v623 = vmul.f32 %v621, %v621
        %v624 = vmul.f32 %v622, %v622
        %v625 = vsel %vm611, %v623, 0.0
        %626 = vadd.xlane.f32.xlu0 %v625
        %v627 = vpop.xlane.xlu0 %626
        %v628 = vsel %vm611, %v624, 0.0
        %629 = vadd.xlane.f32.xlu0 %v628
        %v630 = vpop.xlane.xlu0 %629
        %v631 = vmul.f32 %v627, %v618
        %v632 = vmul.f32 %v630, %v618
        %v633 = vadd.f32 %v631, 1e-05
        %v634 = vadd.f32 %v632, 1e-05
        %v635 = vrsqrt.pop %v633
        %v636 = vrsqrt.pop %v634
        %v637 = vmul.f32 %v621, %v635
        %v638 = vmul.f32 %v622, %v636
        %v640 = vlaneseq
        %v641 = vshrl.u32 %v640, 7
        %v642 = vsub.s32 0, %v641
        %v643 = vrot.slane %v609, %v642
        %v645 = vmul.f32 %v637, %v643
        %v646 = vmul.f32 %v638, %v643
        %v648 = vlaneseq
        %v649 = vshrl.u32 %v648, 7
        %v650 = vsub.s32 0, %v649
        %v651 = vrot.slane %v610, %v650
        %v653 = vadd.f32 %v645, %v651
        %v654 = vadd.f32 %v646, %v651
        %v655 = vld [vmem:[%s566] sm:$0xff]
        %v656 = vld [vmem:[%s566 + $0x8] sm:$0xff]
        %v657 = vld [vmem:[%s566 + $0x10] sm:$0xff]
        %v658 = vld [vmem:[%s566 + $0x18] sm:$0xff]
        %v660 = vsel %vm611, %v653, 0
        %v663 = vsel %vm611, %v654, 0
        %665 = vmatprep.subr.mxu0 0.0
        %666 = vmatpush1.msra.mxu0 %v655
        %667 = vmatprep.subr.mxu0 0.0
        %668 = vmatpush1.msra.mxu0 %v656
        %669 = vmatprep.subr.mxu0 0.0
        %670 = vmatpush1.msra.mxu0 %v657
        %671 = vmatprep.subr.mxu0 0.0
        %672 = vmatpush1.msra.mxu0 %v658
        %673 = vmatprep.subr.mxu0 0.0
        %674 = vmatpush1.msra.mxu0 0.0
        %675 = vmatprep.subr.mxu0 0.0
        %676 = vmatpush1.msra.mxu0 0.0
        %677 = vmatprep.subr.mxu0 0.0
        %678 = vmatpush1.msra.mxu0 0.0
        %679 = vmatprep.subr.mxu0 0.0
        %680 = vmatpush1.msra.mxu0 0.0
        %681 = vmatprep.subr.mxu0 0.0
        %682 = vmatpush1.msra.mxu0 0.0
        %683 = vmatprep.subr.mxu0 0.0
        %684 = vmatpush1.msra.mxu0 0.0
        %685 = vmatprep.subr.mxu0 0.0
        %686 = vmatpush1.msra.mxu0 0.0
        %687 = vmatprep.subr.mxu0 0.0
        %688 = vmatpush1.msra.mxu0 0.0
        %689 = vmatprep.subr.mxu0 0.0
        %690 = vmatpush1.msra.mxu0 0.0
        %691 = vmatprep.subr.mxu0 0.0
        %692 = vmatpush1.msra.mxu0 0.0
        %693 = vmatprep.subr.mxu0 0.0
        %694 = vmatpush1.msra.mxu0 0.0
        %695 = vmatprep.subr.mxu0 0.0
        %696 = vmatpush1.msra.mxu0 0.0
        %697 = vmatprep.subr.mxu0 0.0
        %698 = vmatpush1.msra.mxu0 0.0
        %699 = vmatprep.subr.mxu0 0.0
        %700 = vmatpush1.msra.mxu0 0.0
        %701 = vmatprep.subr.mxu0 0.0
        %702 = vmatpush1.msra.mxu0 0.0
        %703 = vmatprep.subr.mxu0 0.0
        %704 = vmatpush1.msra.mxu0 0.0
        %705 = vmatprep.subr.mxu0 0.0
        %706 = vmatpush1.msra.mxu0 0.0
        %707 = vmatprep.subr.mxu0 0.0
        %708 = vmatpush1.msra.mxu0 0.0
        %709 = vmatprep.subr.mxu0 0.0
        %710 = vmatpush1.msra.mxu0 0.0
        %711 = vmatprep.subr.mxu0 0.0
        %712 = vmatpush1.msra.mxu0 0.0
        %713 = vmatprep.subr.mxu0 0.0
        %714 = vmatpush1.msra.mxu0 0.0
        %715 = vmatprep.subr.mxu0 0.0
        %716 = vmatpush1.msra.mxu0 0.0
        %717 = vmatprep.subr.mxu0 0.0
        %718 = vmatpush1.msra.mxu0 0.0
        %719 = vmatprep.subr.mxu0 0.0
        %720 = vmatpush1.msra.mxu0 0.0
        %721 = vmatprep.subr.mxu0 0.0
        %722 = vmatpush1.msra.mxu0 0.0
        %723 = vmatprep.subr.mxu0 0.0
        %724 = vmatpush1.msra.mxu0 0.0
        %725 = vmatprep.subr.mxu0 0.0
        %726 = vmatpush1.msra.mxu0 0.0
        %727 = vmatprep.subr.mxu0 0.0
        %728 = vmatpush1.msra.mxu0 0.0
        %729 = vmatprep.mubr.f32.mxu0 0.0
        %730 = vmatmul.mubr.f32.gmra.mrb[0].mxu0 %v660
        %v731 = vpop.f32.mrb[0].mxu0
        %v732 = vadd.f32 0.0, %v731
        %v733 = vpop.f32.mrb[0].mxu0
        %734 = vmatprep.mubr.f32.mxu0 0.0
        %735 = vmatmul.mubr.f32.gmra.mrb[0].mxu0 %v663
        %v736 = vpop.f32.mrb[0].mxu0
        %v737 = vadd.f32 0.0, %v736
        %v738 = vpop.f32.mrb[0].mxu0
        %739 = vdwg.mxu0
        %v740 = vmul.f32 %v732, 0.35355338
        %v741 = vmul.f32 %v737, 0.35355338
        %743 = vrot.lane.b32.xlu0 %v732, 96
        %v744 = vpop.permute.xlu0 %743
        %vm745 = vcmask 64512
        %v747 = vsel %vm745, %v740, 0
        %v749 = vsel %vm745, %v744, 0
        %751 = vmatprep.subr.mxu0 0.0
        %752 = vmatpush1.xpose.msra.mxu0 %v749
        %753 = vmatprep.subr.mxu0 0.0
        %754 = vmatpush1.xpose.msra.mxu0 0.0
        %755 = vmatprep.subr.mxu0 0.0
        %756 = vmatpush1.xpose.msra.mxu0 0.0
        %757 = vmatprep.subr.mxu0 0.0
        %758 = vmatpush1.xpose.msra.mxu0 0.0
        %759 = vmatprep.subr.mxu0 0.0
        %760 = vmatpush1.xpose.msra.mxu0 0.0
        %761 = vmatprep.subr.mxu0 0.0
        %762 = vmatpush1.xpose.msra.mxu0 0.0
        %763 = vmatprep.subr.mxu0 0.0
        %764 = vmatpush1.xpose.msra.mxu0 0.0
        %765 = vmatprep.subr.mxu0 0.0
        %766 = vmatpush1.xpose.msra.mxu0 0.0
        %767 = vmatprep.subr.mxu0 0.0
        %768 = vmatpush1.xpose.msra.mxu0 0.0
        %769 = vmatprep.subr.mxu0 0.0
        %770 = vmatpush1.xpose.msra.mxu0 0.0
        %771 = vmatprep.subr.mxu0 0.0
        %772 = vmatpush1.xpose.msra.mxu0 0.0
        %773 = vmatprep.subr.mxu0 0.0
        %774 = vmatpush1.xpose.msra.mxu0 0.0
        %775 = vmatprep.subr.mxu0 0.0
        %776 = vmatpush1.xpose.msra.mxu0 0.0
        %777 = vmatprep.subr.mxu0 0.0
        %778 = vmatpush1.xpose.msra.mxu0 0.0
        %779 = vmatprep.subr.mxu0 0.0
        %780 = vmatpush1.xpose.msra.mxu0 0.0
        %781 = vmatprep.subr.mxu0 0.0
        %782 = vmatpush1.xpose.msra.mxu0 0.0
        %783 = vmatprep.subr.mxu0 0.0
        %784 = vmatpush1.xpose.msra.mxu0 0.0
        %785 = vmatprep.subr.mxu0 0.0
        %786 = vmatpush1.xpose.msra.mxu0 0.0
        %787 = vmatprep.subr.mxu0 0.0
        %788 = vmatpush1.xpose.msra.mxu0 0.0
        %789 = vmatprep.subr.mxu0 0.0
        %790 = vmatpush1.xpose.msra.mxu0 0.0
        %791 = vmatprep.subr.mxu0 0.0
        %792 = vmatpush1.xpose.msra.mxu0 0.0
        %793 = vmatprep.subr.mxu0 0.0
        %794 = vmatpush1.xpose.msra.mxu0 0.0
        %795 = vmatprep.subr.mxu0 0.0
        %796 = vmatpush1.xpose.msra.mxu0 0.0
        %797 = vmatprep.subr.mxu0 0.0
        %798 = vmatpush1.xpose.msra.mxu0 0.0
        %799 = vmatprep.subr.mxu0 0.0
        %800 = vmatpush1.xpose.msra.mxu0 0.0
        %801 = vmatprep.subr.mxu0 0.0
        %802 = vmatpush1.xpose.msra.mxu0 0.0
        %803 = vmatprep.subr.mxu0 0.0
        %804 = vmatpush1.xpose.msra.mxu0 0.0
        %805 = vmatprep.subr.mxu0 0.0
        %806 = vmatpush1.xpose.msra.mxu0 0.0
        %807 = vmatprep.subr.mxu0 0.0
        %808 = vmatpush1.xpose.msra.mxu0 0.0
        %809 = vmatprep.subr.mxu0 0.0
        %810 = vmatpush1.xpose.msra.mxu0 0.0
        %811 = vmatprep.subr.mxu0 0.0
        %812 = vmatpush1.xpose.msra.mxu0 0.0
        %813 = vmatprep.subr.mxu0 0.0
        %814 = vmatpush1.xpose.msra.mxu0 0.0
        %815 = vmatprep.mubr.f32.mxu0 0.0
        %816 = vmatmul.mubr.f32.gmra.mrb[0].mxu0 %v747
        %v817 = vpop.f32.mrb[0].mxu0
        %v818 = vadd.f32 0.0, %v817
        %v819 = vpop.f32.mrb[0].mxu0
        %820 = vdwg.mxu0
        %822 = vrot.lane.b32.xlu0 %v737, 96
        %v823 = vpop.permute.xlu0 %822
        %v825 = vsel %vm745, %v741, 0
        %v827 = vsel %vm745, %v823, 0
        %829 = vmatprep.subr.mxu0 0.0
        %830 = vmatpush1.xpose.msra.mxu0 %v827
        %831 = vmatprep.subr.mxu0 0.0
        %832 = vmatpush1.xpose.msra.mxu0 0.0
        %833 = vmatprep.subr.mxu0 0.0
        %834 = vmatpush1.xpose.msra.mxu0 0.0
        %835 = vmatprep.subr.mxu0 0.0
        %836 = vmatpush1.xpose.msra.mxu0 0.0
        %837 = vmatprep.subr.mxu0 0.0
        %838 = vmatpush1.xpose.msra.mxu0 0.0
        %839 = vmatprep.subr.mxu0 0.0
        %840 = vmatpush1.xpose.msra.mxu0 0.0
        %841 = vmatprep.subr.mxu0 0.0
        %842 = vmatpush1.xpose.msra.mxu0 0.0
        %843 = vmatprep.subr.mxu0 0.0
        %844 = vmatpush1.xpose.msra.mxu0 0.0
        %845 = vmatprep.subr.mxu0 0.0
        %846 = vmatpush1.xpose.msra.mxu0 0.0
        %847 = vmatprep.subr.mxu0 0.0
        %848 = vmatpush1.xpose.msra.mxu0 0.0
        %849 = vmatprep.subr.mxu0 0.0
        %850 = vmatpush1.xpose.msra.mxu0 0.0
        %851 = vmatprep.subr.mxu0 0.0
        %852 = vmatpush1.xpose.msra.mxu0 0.0
        %853 = vmatprep.subr.mxu0 0.0
        %854 = vmatpush1.xpose.msra.mxu0 0.0
        %855 = vmatprep.subr.mxu0 0.0
        %856 = vmatpush1.xpose.msra.mxu0 0.0
        %857 = vmatprep.subr.mxu0 0.0
        %858 = vmatpush1.xpose.msra.mxu0 0.0
        %859 = vmatprep.subr.mxu0 0.0
        %860 = vmatpush1.xpose.msra.mxu0 0.0
        %861 = vmatprep.subr.mxu0 0.0
        %862 = vmatpush1.xpose.msra.mxu0 0.0
        %863 = vmatprep.subr.mxu0 0.0
        %864 = vmatpush1.xpose.msra.mxu0 0.0
        %865 = vmatprep.subr.mxu0 0.0
        %866 = vmatpush1.xpose.msra.mxu0 0.0
        %867 = vmatprep.subr.mxu0 0.0
        %868 = vmatpush1.xpose.msra.mxu0 0.0
        %869 = vmatprep.subr.mxu0 0.0
        %870 = vmatpush1.xpose.msra.mxu0 0.0
        %871 = vmatprep.subr.mxu0 0.0
        %872 = vmatpush1.xpose.msra.mxu0 0.0
        %873 = vmatprep.subr.mxu0 0.0
        %874 = vmatpush1.xpose.msra.mxu0 0.0
        %875 = vmatprep.subr.mxu0 0.0
        %876 = vmatpush1.xpose.msra.mxu0 0.0
        %877 = vmatprep.subr.mxu0 0.0
        %878 = vmatpush1.xpose.msra.mxu0 0.0
        %879 = vmatprep.subr.mxu0 0.0
        %880 = vmatpush1.xpose.msra.mxu0 0.0
        %881 = vmatprep.subr.mxu0 0.0
        %882 = vmatpush1.xpose.msra.mxu0 0.0
        %883 = vmatprep.subr.mxu0 0.0
        %884 = vmatpush1.xpose.msra.mxu0 0.0
        %885 = vmatprep.subr.mxu0 0.0
        %886 = vmatpush1.xpose.msra.mxu0 0.0
        %887 = vmatprep.subr.mxu0 0.0
        %888 = vmatpush1.xpose.msra.mxu0 0.0
        %889 = vmatprep.subr.mxu0 0.0
        %890 = vmatpush1.xpose.msra.mxu0 0.0
        %891 = vmatprep.subr.mxu0 0.0
        %892 = vmatpush1.xpose.msra.mxu0 0.0
        %893 = vmatprep.mubr.f32.mxu0 0.0
        %894 = vmatmul.mubr.f32.gmra.mrb[0].mxu0 %v825
        %v895 = vpop.f32.mrb[0].mxu0
        %v896 = vadd.f32 0.0, %v895
        %v897 = vpop.f32.mrb[0].mxu0
        %898 = vdwg.mxu0
        %v899 = vsel %vm745, %v818, -inf
        %900 = vmax.xlane.f32.xlu0 %v899
        %v901 = vpop.xlane.xlu0 %900
        %v902 = vsel %vm745, %v896, -inf
        %903 = vmax.xlane.f32.xlu0 %v902
        %v904 = vpop.xlane.xlu0 %903
        %v905 = vsub.f32 %v818, %v901
        %v906 = vsub.f32 %v896, %v904
        %v907 = vmul.f32 %v905, 1.442695
        %v908 = vpow.pop %v907
        %v909 = vmul.f32 %v906, 1.442695
        %v910 = vpow.pop %v909
        %v911 = vsel %vm745, %v908, 0.0
        %912 = vadd.xlane.f32.xlu0 %v911
        %v913 = vpop.xlane.xlu0 %912
        %v914 = vsel %vm745, %v910, 0.0
        %915 = vadd.xlane.f32.xlu0 %v914
        %v916 = vpop.xlane.xlu0 %915
        %v917 = vrcp.pop %v913
        %v918 = vrcp.pop %v916
        %v919 = vmul.f32 %v908, %v917
        %v920 = vmul.f32 %v910, %v918
        %921 = vrot.lane.b32.xlu0 %v732, 64
        %v922 = vpop.permute.xlu0 %921
        %v925 = vsel %vm745, %v919, 0
        %927 = vmatprep.subr.mxu0 0.0
        %928 = vmatpush1.msra.mxu0 %v922
        %929 = vmatprep.subr.mxu0 0.0
        %930 = vmatpush1.msra.mxu0 0.0
        %931 = vmatprep.subr.mxu0 0.0
        %932 = vmatpush1.msra.mxu0 0.0
        %933 = vmatprep.subr.mxu0 0.0
        %934 = vmatpush1.msra.mxu0 0.0
        %935 = vmatprep.subr.mxu0 0.0
        %936 = vmatpush1.msra.mxu0 0.0
        %937 = vmatprep.subr.mxu0 0.0
        %938 = vmatpush1.msra.mxu0 0.0
        %939 = vmatprep.subr.mxu0 0.0
        %940 = vmatpush1.msra.mxu0 0.0
        %941 = vmatprep.subr.mxu0 0.0
        %942 = vmatpush1.msra.mxu0 0.0
        %943 = vmatprep.subr.mxu0 0.0
        %944 = vmatpush1.msra.mxu0 0.0
        %945 = vmatprep.subr.mxu0 0.0
        %946 = vmatpush1.msra.mxu0 0.0
        %947 = vmatprep.subr.mxu0 0.0
        %948 = vmatpush1.msra.mxu0 0.0
        %949 = vmatprep.subr.mxu0 0.0
        %950 = vmatpush1.msra.mxu0 0.0
        %951 = vmatprep.subr.mxu0 0.0
        %952 = vmatpush1.msra.mxu0 0.0
        %953 = vmatprep.subr.mxu0 0.0
        %954 = vmatpush1.msra.mxu0 0.0
        %955 = vmatprep.subr.mxu0 0.0
        %956 = vmatpush1.msra.mxu0 0.0
        %957 = vmatprep.subr.mxu0 0.0
        %958 = vmatpush1.msra.mxu0 0.0
        %959 = vmatprep.subr.mxu0 0.0
        %960 = vmatpush1.msra.mxu0 0.0
        %961 = vmatprep.subr.mxu0 0.0
        %962 = vmatpush1.msra.mxu0 0.0
        %963 = vmatprep.subr.mxu0 0.0
        %964 = vmatpush1.msra.mxu0 0.0
        %965 = vmatprep.subr.mxu0 0.0
        %966 = vmatpush1.msra.mxu0 0.0
        %967 = vmatprep.subr.mxu0 0.0
        %968 = vmatpush1.msra.mxu0 0.0
        %969 = vmatprep.subr.mxu0 0.0
        %970 = vmatpush1.msra.mxu0 0.0
        %971 = vmatprep.subr.mxu0 0.0
        %972 = vmatpush1.msra.mxu0 0.0
        %973 = vmatprep.subr.mxu0 0.0
        %974 = vmatpush1.msra.mxu0 0.0
        %975 = vmatprep.subr.mxu0 0.0
        %976 = vmatpush1.msra.mxu0 0.0
        %977 = vmatprep.subr.mxu0 0.0
        %978 = vmatpush1.msra.mxu0 0.0
        %979 = vmatprep.subr.mxu0 0.0
        %980 = vmatpush1.msra.mxu0 0.0
        %981 = vmatprep.subr.mxu0 0.0
        %982 = vmatpush1.msra.mxu0 0.0
        %983 = vmatprep.subr.mxu0 0.0
        %984 = vmatpush1.msra.mxu0 0.0
        %985 = vmatprep.subr.mxu0 0.0
        %986 = vmatpush1.msra.mxu0 0.0
        %987 = vmatprep.subr.mxu0 0.0
        %988 = vmatpush1.msra.mxu0 0.0
        %989 = vmatprep.subr.mxu0 0.0
        %990 = vmatpush1.msra.mxu0 0.0
        %991 = vmatprep.mubr.f32.mxu0 0.0
        %992 = vmatmul.mubr.f32.gmra.mrb[0].mxu0 %v925
        %v993 = vpop.f32.mrb[0].mxu0
        %v994 = vadd.f32 0.0, %v993
        %v995 = vpop.f32.mrb[0].mxu0
        %996 = vdwg.mxu0
        %997 = vrot.lane.b32.xlu0 %v737, 64
        %v998 = vpop.permute.xlu0 %997
        %v1001 = vsel %vm745, %v920, 0
        %1003 = vmatprep.subr.mxu0 0.0
        %1004 = vmatpush1.msra.mxu0 %v998
        %1005 = vmatprep.subr.mxu0 0.0
        %1006 = vmatpush1.msra.mxu0 0.0
        %1007 = vmatprep.subr.mxu0 0.0
        %1008 = vmatpush1.msra.mxu0 0.0
        %1009 = vmatprep.subr.mxu0 0.0
        %1010 = vmatpush1.msra.mxu0 0.0
        %1011 = vmatprep.subr.mxu0 0.0
        %1012 = vmatpush1.msra.mxu0 0.0
        %1013 = vmatprep.subr.mxu0 0.0
        %1014 = vmatpush1.msra.mxu0 0.0
        %1015 = vmatprep.subr.mxu0 0.0
        %1016 = vmatpush1.msra.mxu0 0.0
        %1017 = vmatprep.subr.mxu0 0.0
        %1018 = vmatpush1.msra.mxu0 0.0
        %1019 = vmatprep.subr.mxu0 0.0
        %1020 = vmatpush1.msra.mxu0 0.0
        %1021 = vmatprep.subr.mxu0 0.0
        %1022 = vmatpush1.msra.mxu0 0.0
        %1023 = vmatprep.subr.mxu0 0.0
        %1024 = vmatpush1.msra.mxu0 0.0
        %1025 = vmatprep.subr.mxu0 0.0
        %1026 = vmatpush1.msra.mxu0 0.0
        %1027 = vmatprep.subr.mxu0 0.0
        %1028 = vmatpush1.msra.mxu0 0.0
        %1029 = vmatprep.subr.mxu0 0.0
        %1030 = vmatpush1.msra.mxu0 0.0
        %1031 = vmatprep.subr.mxu0 0.0
        %1032 = vmatpush1.msra.mxu0 0.0
        %1033 = vmatprep.subr.mxu0 0.0
        %1034 = vmatpush1.msra.mxu0 0.0
        %1035 = vmatprep.subr.mxu0 0.0
        %1036 = vmatpush1.msra.mxu0 0.0
        %1037 = vmatprep.subr.mxu0 0.0
        %1038 = vmatpush1.msra.mxu0 0.0
        %1039 = vmatprep.subr.mxu0 0.0
        %1040 = vmatpush1.msra.mxu0 0.0
        %1041 = vmatprep.subr.mxu0 0.0
        %1042 = vmatpush1.msra.mxu0 0.0
        %1043 = vmatprep.subr.mxu0 0.0
        %1044 = vmatpush1.msra.mxu0 0.0
        %1045 = vmatprep.subr.mxu0 0.0
        %1046 = vmatpush1.msra.mxu0 0.0
        %1047 = vmatprep.subr.mxu0 0.0
        %1048 = vmatpush1.msra.mxu0 0.0
        %1049 = vmatprep.subr.mxu0 0.0
        %1050 = vmatpush1.msra.mxu0 0.0
        %1051 = vmatprep.subr.mxu0 0.0
        %1052 = vmatpush1.msra.mxu0 0.0
        %1053 = vmatprep.subr.mxu0 0.0
        %1054 = vmatpush1.msra.mxu0 0.0
        %1055 = vmatprep.subr.mxu0 0.0
        %1056 = vmatpush1.msra.mxu0 0.0
        %1057 = vmatprep.subr.mxu0 0.0
        %1058 = vmatpush1.msra.mxu0 0.0
        %1059 = vmatprep.subr.mxu0 0.0
        %1060 = vmatpush1.msra.mxu0 0.0
        %1061 = vmatprep.subr.mxu0 0.0
        %1062 = vmatpush1.msra.mxu0 0.0
        %1063 = vmatprep.subr.mxu0 0.0
        %1064 = vmatpush1.msra.mxu0 0.0
        %1065 = vmatprep.subr.mxu0 0.0
        %1066 = vmatpush1.msra.mxu0 0.0
        %1067 = vmatprep.mubr.f32.mxu0 0.0
        %1068 = vmatmul.mubr.f32.gmra.mrb[0].mxu0 %v1001
        %v1069 = vpop.f32.mrb[0].mxu0
        %v1070 = vadd.f32 0.0, %v1069
        %v1071 = vpop.f32.mrb[0].mxu0
        %1072 = vdwg.mxu0
        %1073 = vrot.lane.b32.xlu0 %v740, 120
        %v1074 = vpop.permute.xlu0 %1073
        %1075 = vrot.lane.b32.xlu0 %v732, 88
        %v1076 = vpop.permute.xlu0 %1075
        %v1077 = vsel %vm745, %v1074, 0
        %v1079 = vsel %vm745, %v1076, 0
        %1081 = vmatprep.subr.mxu0 0.0
        %1082 = vmatpush1.xpose.msra.mxu0 %v1079
        %1083 = vmatprep.subr.mxu0 0.0
        %1084 = vmatpush1.xpose.msra.mxu0 0.0
        %1085 = vmatprep.subr.mxu0 0.0
        %1086 = vmatpush1.xpose.msra.mxu0 0.0
        %1087 = vmatprep.subr.mxu0 0.0
        %1088 = vmatpush1.xpose.msra.mxu0 0.0
        %1089 = vmatprep.subr.mxu0 0.0
        %1090 = vmatpush1.xpose.msra.mxu0 0.0
        %1091 = vmatprep.subr.mxu0 0.0
        %1092 = vmatpush1.xpose.msra.mxu0 0.0
        %1093 = vmatprep.subr.mxu0 0.0
        %1094 = vmatpush1.xpose.msra.mxu0 0.0
        %1095 = vmatprep.subr.mxu0 0.0
        %1096 = vmatpush1.xpose.msra.mxu0 0.0
        %1097 = vmatprep.subr.mxu0 0.0
        %1098 = vmatpush1.xpose.msra.mxu0 0.0
        %1099 = vmatprep.subr.mxu0 0.0
        %1100 = vmatpush1.xpose.msra.mxu0 0.0
        %1101 = vmatprep.subr.mxu0 0.0
        %1102 = vmatpush1.xpose.msra.mxu0 0.0
        %1103 = vmatprep.subr.mxu0 0.0
        %1104 = vmatpush1.xpose.msra.mxu0 0.0
        %1105 = vmatprep.subr.mxu0 0.0
        %1106 = vmatpush1.xpose.msra.mxu0 0.0
        %1107 = vmatprep.subr.mxu0 0.0
        %1108 = vmatpush1.xpose.msra.mxu0 0.0
        %1109 = vmatprep.subr.mxu0 0.0
        %1110 = vmatpush1.xpose.msra.mxu0 0.0
        %1111 = vmatprep.subr.mxu0 0.0
        %1112 = vmatpush1.xpose.msra.mxu0 0.0
        %1113 = vmatprep.subr.mxu0 0.0
        %1114 = vmatpush1.xpose.msra.mxu0 0.0
        %1115 = vmatprep.subr.mxu0 0.0
        %1116 = vmatpush1.xpose.msra.mxu0 0.0
        %1117 = vmatprep.subr.mxu0 0.0
        %1118 = vmatpush1.xpose.msra.mxu0 0.0
        %1119 = vmatprep.subr.mxu0 0.0
        %1120 = vmatpush1.xpose.msra.mxu0 0.0
        %1121 = vmatprep.subr.mxu0 0.0
        %1122 = vmatpush1.xpose.msra.mxu0 0.0
        %1123 = vmatprep.subr.mxu0 0.0
        %1124 = vmatpush1.xpose.msra.mxu0 0.0
        %1125 = vmatprep.subr.mxu0 0.0
        %1126 = vmatpush1.xpose.msra.mxu0 0.0
        %1127 = vmatprep.subr.mxu0 0.0
        %1128 = vmatpush1.xpose.msra.mxu0 0.0
        %1129 = vmatprep.subr.mxu0 0.0
        %1130 = vmatpush1.xpose.msra.mxu0 0.0
        %1131 = vmatprep.subr.mxu0 0.0
        %1132 = vmatpush1.xpose.msra.mxu0 0.0
        %1133 = vmatprep.subr.mxu0 0.0
        %1134 = vmatpush1.xpose.msra.mxu0 0.0
        %1135 = vmatprep.subr.mxu0 0.0
        %1136 = vmatpush1.xpose.msra.mxu0 0.0
        %1137 = vmatprep.subr.mxu0 0.0
        %1138 = vmatpush1.xpose.msra.mxu0 0.0
        %1139 = vmatprep.subr.mxu0 0.0
        %1140 = vmatpush1.xpose.msra.mxu0 0.0
        %1141 = vmatprep.subr.mxu0 0.0
        %1142 = vmatpush1.xpose.msra.mxu0 0.0
        %1143 = vmatprep.subr.mxu0 0.0
        %1144 = vmatpush1.xpose.msra.mxu0 0.0
        %1145 = vmatprep.mubr.f32.mxu0 0.0
        %1146 = vmatmul.mubr.f32.gmra.mrb[0].mxu0 %v1077
        %v1147 = vpop.f32.mrb[0].mxu0
        %v1148 = vadd.f32 0.0, %v1147
        %v1149 = vpop.f32.mrb[0].mxu0
        %1150 = vdwg.mxu0
        %1151 = vrot.lane.b32.xlu0 %v741, 120
        %v1152 = vpop.permute.xlu0 %1151
        %1153 = vrot.lane.b32.xlu0 %v737, 88
        %v1154 = vpop.permute.xlu0 %1153
        %v1155 = vsel %vm745, %v1152, 0
        %v1157 = vsel %vm745, %v1154, 0
        %1159 = vmatprep.subr.mxu0 0.0
        %1160 = vmatpush1.xpose.msra.mxu0 %v1157
        %1161 = vmatprep.subr.mxu0 0.0
        %1162 = vmatpush1.xpose.msra.mxu0 0.0
        %1163 = vmatprep.subr.mxu0 0.0
        %1164 = vmatpush1.xpose.msra.mxu0 0.0
        %1165 = vmatprep.subr.mxu0 0.0
        %1166 = vmatpush1.xpose.msra.mxu0 0.0
        %1167 = vmatprep.subr.mxu0 0.0
        %1168 = vmatpush1.xpose.msra.mxu0 0.0
        %1169 = vmatprep.subr.mxu0 0.0
        %1170 = vmatpush1.xpose.msra.mxu0 0.0
        %1171 = vmatprep.subr.mxu0 0.0
        %1172 = vmatpush1.xpose.msra.mxu0 0.0
        %1173 = vmatprep.subr.mxu0 0.0
        %1174 = vmatpush1.xpose.msra.mxu0 0.0
        %1175 = vmatprep.subr.mxu0 0.0
        %1176 = vmatpush1.xpose.msra.mxu0 0.0
        %1177 = vmatprep.subr.mxu0 0.0
        %1178 = vmatpush1.xpose.msra.mxu0 0.0
        %1179 = vmatprep.subr.mxu0 0.0
        %1180 = vmatpush1.xpose.msra.mxu0 0.0
        %1181 = vmatprep.subr.mxu0 0.0
        %1182 = vmatpush1.xpose.msra.mxu0 0.0
        %1183 = vmatprep.subr.mxu0 0.0
        %1184 = vmatpush1.xpose.msra.mxu0 0.0
        %1185 = vmatprep.subr.mxu0 0.0
        %1186 = vmatpush1.xpose.msra.mxu0 0.0
        %1187 = vmatprep.subr.mxu0 0.0
        %1188 = vmatpush1.xpose.msra.mxu0 0.0
        %1189 = vmatprep.subr.mxu0 0.0
        %1190 = vmatpush1.xpose.msra.mxu0 0.0
        %1191 = vmatprep.subr.mxu0 0.0
        %1192 = vmatpush1.xpose.msra.mxu0 0.0
        %1193 = vmatprep.subr.mxu0 0.0
        %1194 = vmatpush1.xpose.msra.mxu0 0.0
        %1195 = vmatprep.subr.mxu0 0.0
        %1196 = vmatpush1.xpose.msra.mxu0 0.0
        %1197 = vmatprep.subr.mxu0 0.0
        %1198 = vmatpush1.xpose.msra.mxu0 0.0
        %1199 = vmatprep.subr.mxu0 0.0
        %1200 = vmatpush1.xpose.msra.mxu0 0.0
        %1201 = vmatprep.subr.mxu0 0.0
        %1202 = vmatpush1.xpose.msra.mxu0 0.0
        %1203 = vmatprep.subr.mxu0 0.0
        %1204 = vmatpush1.xpose.msra.mxu0 0.0
        %1205 = vmatprep.subr.mxu0 0.0
        %1206 = vmatpush1.xpose.msra.mxu0 0.0
        %1207 = vmatprep.subr.mxu0 0.0
        %1208 = vmatpush1.xpose.msra.mxu0 0.0
        %1209 = vmatprep.subr.mxu0 0.0
        %1210 = vmatpush1.xpose.msra.mxu0 0.0
        %1211 = vmatprep.subr.mxu0 0.0
        %1212 = vmatpush1.xpose.msra.mxu0 0.0
        %1213 = vmatprep.subr.mxu0 0.0
        %1214 = vmatpush1.xpose.msra.mxu0 0.0
        %1215 = vmatprep.subr.mxu0 0.0
        %1216 = vmatpush1.xpose.msra.mxu0 0.0
        %1217 = vmatprep.subr.mxu0 0.0
        %1218 = vmatpush1.xpose.msra.mxu0 0.0
        %1219 = vmatprep.subr.mxu0 0.0
        %1220 = vmatpush1.xpose.msra.mxu0 0.0
        %1221 = vmatprep.subr.mxu0 0.0
        %1222 = vmatpush1.xpose.msra.mxu0 0.0
        %1223 = vmatprep.mubr.f32.mxu0 0.0
        %1224 = vmatmul.mubr.f32.gmra.mrb[0].mxu0 %v1155
        %v1225 = vpop.f32.mrb[0].mxu0
        %v1226 = vadd.f32 0.0, %v1225
        %v1227 = vpop.f32.mrb[0].mxu0
        %1228 = vdwg.mxu0
        %v1229 = vsel %vm745, %v1148, -inf
        %1230 = vmax.xlane.f32.xlu0 %v1229
        %v1231 = vpop.xlane.xlu0 %1230
        %v1232 = vsel %vm745, %v1226, -inf
        %1233 = vmax.xlane.f32.xlu0 %v1232
        %v1234 = vpop.xlane.xlu0 %1233
        %v1235 = vsub.f32 %v1148, %v1231
        %v1236 = vsub.f32 %v1226, %v1234
        %v1237 = vmul.f32 %v1235, 1.442695
        %v1238 = vpow.pop %v1237
        %v1239 = vmul.f32 %v1236, 1.442695
        %v1240 = vpow.pop %v1239
        %v1241 = vsel %vm745, %v1238, 0.0
        %1242 = vadd.xlane.f32.xlu0 %v1241
        %v1243 = vpop.xlane.xlu0 %1242
        %v1244 = vsel %vm745, %v1240, 0.0
        %1245 = vadd.xlane.f32.xlu0 %v1244
        %v1246 = vpop.xlane.xlu0 %1245
        %v1247 = vrcp.pop %v1243
        %v1248 = vrcp.pop %v1246
        %v1249 = vmul.f32 %v1238, %v1247
        %v1250 = vmul.f32 %v1240, %v1248
        %1251 = vrot.lane.b32.xlu0 %v732, 56
        %v1252 = vpop.permute.xlu0 %1251
        %v1255 = vsel %vm745, %v1249, 0
        %1257 = vmatprep.subr.mxu0 0.0
        %1258 = vmatpush1.msra.mxu0 %v1252
        %1259 = vmatprep.subr.mxu0 0.0
        %1260 = vmatpush1.msra.mxu0 0.0
        %1261 = vmatprep.subr.mxu0 0.0
        %1262 = vmatpush1.msra.mxu0 0.0
        %1263 = vmatprep.subr.mxu0 0.0
        %1264 = vmatpush1.msra.mxu0 0.0
        %1265 = vmatprep.subr.mxu0 0.0
        %1266 = vmatpush1.msra.mxu0 0.0
        %1267 = vmatprep.subr.mxu0 0.0
        %1268 = vmatpush1.msra.mxu0 0.0
        %1269 = vmatprep.subr.mxu0 0.0
        %1270 = vmatpush1.msra.mxu0 0.0
        %1271 = vmatprep.subr.mxu0 0.0
        %1272 = vmatpush1.msra.mxu0 0.0
        %1273 = vmatprep.subr.mxu0 0.0
        %1274 = vmatpush1.msra.mxu0 0.0
        %1275 = vmatprep.subr.mxu0 0.0
        %1276 = vmatpush1.msra.mxu0 0.0
        %1277 = vmatprep.subr.mxu0 0.0
        %1278 = vmatpush1.msra.mxu0 0.0
        %1279 = vmatprep.subr.mxu0 0.0
        %1280 = vmatpush1.msra.mxu0 0.0
        %1281 = vmatprep.subr.mxu0 0.0
        %1282 = vmatpush1.msra.mxu0 0.0
        %1283 = vmatprep.subr.mxu0 0.0
        %1284 = vmatpush1.msra.mxu0 0.0
        %1285 = vmatprep.subr.mxu0 0.0
        %1286 = vmatpush1.msra.mxu0 0.0
        %1287 = vmatprep.subr.mxu0 0.0
        %1288 = vmatpush1.msra.mxu0 0.0
        %1289 = vmatprep.subr.mxu0 0.0
        %1290 = vmatpush1.msra.mxu0 0.0
        %1291 = vmatprep.subr.mxu0 0.0
        %1292 = vmatpush1.msra.mxu0 0.0
        %1293 = vmatprep.subr.mxu0 0.0
        %1294 = vmatpush1.msra.mxu0 0.0
        %1295 = vmatprep.subr.mxu0 0.0
        %1296 = vmatpush1.msra.mxu0 0.0
        %1297 = vmatprep.subr.mxu0 0.0
        %1298 = vmatpush1.msra.mxu0 0.0
        %1299 = vmatprep.subr.mxu0 0.0
        %1300 = vmatpush1.msra.mxu0 0.0
        %1301 = vmatprep.subr.mxu0 0.0
        %1302 = vmatpush1.msra.mxu0 0.0
        %1303 = vmatprep.subr.mxu0 0.0
        %1304 = vmatpush1.msra.mxu0 0.0
        %1305 = vmatprep.subr.mxu0 0.0
        %1306 = vmatpush1.msra.mxu0 0.0
        %1307 = vmatprep.subr.mxu0 0.0
        %1308 = vmatpush1.msra.mxu0 0.0
        %1309 = vmatprep.subr.mxu0 0.0
        %1310 = vmatpush1.msra.mxu0 0.0
        %1311 = vmatprep.subr.mxu0 0.0
        %1312 = vmatpush1.msra.mxu0 0.0
        %1313 = vmatprep.subr.mxu0 0.0
        %1314 = vmatpush1.msra.mxu0 0.0
        %1315 = vmatprep.subr.mxu0 0.0
        %1316 = vmatpush1.msra.mxu0 0.0
        %1317 = vmatprep.subr.mxu0 0.0
        %1318 = vmatpush1.msra.mxu0 0.0
        %1319 = vmatprep.subr.mxu0 0.0
        %1320 = vmatpush1.msra.mxu0 0.0
        %1321 = vmatprep.mubr.f32.mxu0 0.0
        %1322 = vmatmul.mubr.f32.gmra.mrb[0].mxu0 %v1255
        %v1323 = vpop.f32.mrb[0].mxu0
        %v1324 = vadd.f32 0.0, %v1323
        %v1325 = vpop.f32.mrb[0].mxu0
        %1326 = vdwg.mxu0
        %1327 = vrot.lane.b32.xlu0 %v737, 56
        %v1328 = vpop.permute.xlu0 %1327
        %v1331 = vsel %vm745, %v1250, 0
        %1333 = vmatprep.subr.mxu0 0.0
        %1334 = vmatpush1.msra.mxu0 %v1328
        %1335 = vmatprep.subr.mxu0 0.0
        %1336 = vmatpush1.msra.mxu0 0.0
        %1337 = vmatprep.subr.mxu0 0.0
        %1338 = vmatpush1.msra.mxu0 0.0
        %1339 = vmatprep.subr.mxu0 0.0
        %1340 = vmatpush1.msra.mxu0 0.0
        %1341 = vmatprep.subr.mxu0 0.0
        %1342 = vmatpush1.msra.mxu0 0.0
        %1343 = vmatprep.subr.mxu0 0.0
        %1344 = vmatpush1.msra.mxu0 0.0
        %1345 = vmatprep.subr.mxu0 0.0
        %1346 = vmatpush1.msra.mxu0 0.0
        %1347 = vmatprep.subr.mxu0 0.0
        %1348 = vmatpush1.msra.mxu0 0.0
        %1349 = vmatprep.subr.mxu0 0.0
        %1350 = vmatpush1.msra.mxu0 0.0
        %1351 = vmatprep.subr.mxu0 0.0
        %1352 = vmatpush1.msra.mxu0 0.0
        %1353 = vmatprep.subr.mxu0 0.0
        %1354 = vmatpush1.msra.mxu0 0.0
        %1355 = vmatprep.subr.mxu0 0.0
        %1356 = vmatpush1.msra.mxu0 0.0
        %1357 = vmatprep.subr.mxu0 0.0
        %1358 = vmatpush1.msra.mxu0 0.0
        %1359 = vmatprep.subr.mxu0 0.0
        %1360 = vmatpush1.msra.mxu0 0.0
        %1361 = vmatprep.subr.mxu0 0.0
        %1362 = vmatpush1.msra.mxu0 0.0
        %1363 = vmatprep.subr.mxu0 0.0
        %1364 = vmatpush1.msra.mxu0 0.0
        %1365 = vmatprep.subr.mxu0 0.0
        %1366 = vmatpush1.msra.mxu0 0.0
        %1367 = vmatprep.subr.mxu0 0.0
        %1368 = vmatpush1.msra.mxu0 0.0
        %1369 = vmatprep.subr.mxu0 0.0
        %1370 = vmatpush1.msra.mxu0 0.0
        %1371 = vmatprep.subr.mxu0 0.0
        %1372 = vmatpush1.msra.mxu0 0.0
        %1373 = vmatprep.subr.mxu0 0.0
        %1374 = vmatpush1.msra.mxu0 0.0
        %1375 = vmatprep.subr.mxu0 0.0
        %1376 = vmatpush1.msra.mxu0 0.0
        %1377 = vmatprep.subr.mxu0 0.0
        %1378 = vmatpush1.msra.mxu0 0.0
        %1379 = vmatprep.subr.mxu0 0.0
        %1380 = vmatpush1.msra.mxu0 0.0
        %1381 = vmatprep.subr.mxu0 0.0
        %1382 = vmatpush1.msra.mxu0 0.0
        %1383 = vmatprep.subr.mxu0 0.0
        %1384 = vmatpush1.msra.mxu0 0.0
        %1385 = vmatprep.subr.mxu0 0.0
        %1386 = vmatpush1.msra.mxu0 0.0
        %1387 = vmatprep.subr.mxu0 0.0
        %1388 = vmatpush1.msra.mxu0 0.0
        %1389 = vmatprep.subr.mxu0 0.0
        %1390 = vmatpush1.msra.mxu0 0.0
        %1391 = vmatprep.subr.mxu0 0.0
        %1392 = vmatpush1.msra.mxu0 0.0
        %1393 = vmatprep.subr.mxu0 0.0
        %1394 = vmatpush1.msra.mxu0 0.0
        %1395 = vmatprep.subr.mxu0 0.0
        %1396 = vmatpush1.msra.mxu0 0.0
        %1397 = vmatprep.mubr.f32.mxu0 0.0
        %1398 = vmatmul.mubr.f32.gmra.mrb[0].mxu0 %v1331
        %v1399 = vpop.f32.mrb[0].mxu0
        %v1400 = vadd.f32 0.0, %v1399
        %v1401 = vpop.f32.mrb[0].mxu0
        %1402 = vdwg.mxu0
        %1403 = vrot.lane.b32.xlu0 %v740, 112
        %v1404 = vpop.permute.xlu0 %1403
        %1405 = vrot.lane.b32.xlu0 %v732, 80
        %v1406 = vpop.permute.xlu0 %1405
        %v1407 = vsel %vm745, %v1404, 0
        %v1409 = vsel %vm745, %v1406, 0
        %1411 = vmatprep.subr.mxu0 0.0
        %1412 = vmatpush1.xpose.msra.mxu0 %v1409
        %1413 = vmatprep.subr.mxu0 0.0
        %1414 = vmatpush1.xpose.msra.mxu0 0.0
        %1415 = vmatprep.subr.mxu0 0.0
        %1416 = vmatpush1.xpose.msra.mxu0 0.0
        %1417 = vmatprep.subr.mxu0 0.0
        %1418 = vmatpush1.xpose.msra.mxu0 0.0
        %1419 = vmatprep.subr.mxu0 0.0
        %1420 = vmatpush1.xpose.msra.mxu0 0.0
        %1421 = vmatprep.subr.mxu0 0.0
        %1422 = vmatpush1.xpose.msra.mxu0 0.0
        %1423 = vmatprep.subr.mxu0 0.0
        %1424 = vmatpush1.xpose.msra.mxu0 0.0
        %1425 = vmatprep.subr.mxu0 0.0
        %1426 = vmatpush1.xpose.msra.mxu0 0.0
        %1427 = vmatprep.subr.mxu0 0.0
        %1428 = vmatpush1.xpose.msra.mxu0 0.0
        %1429 = vmatprep.subr.mxu0 0.0
        %1430 = vmatpush1.xpose.msra.mxu0 0.0
        %1431 = vmatprep.subr.mxu0 0.0
        %1432 = vmatpush1.xpose.msra.mxu0 0.0
        %1433 = vmatprep.subr.mxu0 0.0
        %1434 = vmatpush1.xpose.msra.mxu0 0.0
        %1435 = vmatprep.subr.mxu0 0.0
        %1436 = vmatpush1.xpose.msra.mxu0 0.0
        %1437 = vmatprep.subr.mxu0 0.0
        %1438 = vmatpush1.xpose.msra.mxu0 0.0
        %1439 = vmatprep.subr.mxu0 0.0
        %1440 = vmatpush1.xpose.msra.mxu0 0.0
        %1441 = vmatprep.subr.mxu0 0.0
        %1442 = vmatpush1.xpose.msra.mxu0 0.0
        %1443 = vmatprep.subr.mxu0 0.0
        %1444 = vmatpush1.xpose.msra.mxu0 0.0
        %1445 = vmatprep.subr.mxu0 0.0
        %1446 = vmatpush1.xpose.msra.mxu0 0.0
        %1447 = vmatprep.subr.mxu0 0.0
        %1448 = vmatpush1.xpose.msra.mxu0 0.0
        %1449 = vmatprep.subr.mxu0 0.0
        %1450 = vmatpush1.xpose.msra.mxu0 0.0
        %1451 = vmatprep.subr.mxu0 0.0
        %1452 = vmatpush1.xpose.msra.mxu0 0.0
        %1453 = vmatprep.subr.mxu0 0.0
        %1454 = vmatpush1.xpose.msra.mxu0 0.0
        %1455 = vmatprep.subr.mxu0 0.0
        %1456 = vmatpush1.xpose.msra.mxu0 0.0
        %1457 = vmatprep.subr.mxu0 0.0
        %1458 = vmatpush1.xpose.msra.mxu0 0.0
        %1459 = vmatprep.subr.mxu0 0.0
        %1460 = vmatpush1.xpose.msra.mxu0 0.0
        %1461 = vmatprep.subr.mxu0 0.0
        %1462 = vmatpush1.xpose.msra.mxu0 0.0
        %1463 = vmatprep.subr.mxu0 0.0
        %1464 = vmatpush1.xpose.msra.mxu0 0.0
        %1465 = vmatprep.subr.mxu0 0.0
        %1466 = vmatpush1.xpose.msra.mxu0 0.0
        %1467 = vmatprep.subr.mxu0 0.0
        %1468 = vmatpush1.xpose.msra.mxu0 0.0
        %1469 = vmatprep.subr.mxu0 0.0
        %1470 = vmatpush1.xpose.msra.mxu0 0.0
        %1471 = vmatprep.subr.mxu0 0.0
        %1472 = vmatpush1.xpose.msra.mxu0 0.0
        %1473 = vmatprep.subr.mxu0 0.0
        %1474 = vmatpush1.xpose.msra.mxu0 0.0
        %1475 = vmatprep.mubr.f32.mxu0 0.0
        %1476 = vmatmul.mubr.f32.gmra.mrb[0].mxu0 %v1407
        %v1477 = vpop.f32.mrb[0].mxu0
        %v1478 = vadd.f32 0.0, %v1477
        %v1479 = vpop.f32.mrb[0].mxu0
        %1480 = vdwg.mxu0
        %1481 = vrot.lane.b32.xlu0 %v741, 112
        %v1482 = vpop.permute.xlu0 %1481
        %1483 = vrot.lane.b32.xlu0 %v737, 80
        %v1484 = vpop.permute.xlu0 %1483
        %v1485 = vsel %vm745, %v1482, 0
        %v1487 = vsel %vm745, %v1484, 0
        %1489 = vmatprep.subr.mxu0 0.0
        %1490 = vmatpush1.xpose.msra.mxu0 %v1487
        %1491 = vmatprep.subr.mxu0 0.0
        %1492 = vmatpush1.xpose.msra.mxu0 0.0
        %1493 = vmatprep.subr.mxu0 0.0
        %1494 = vmatpush1.xpose.msra.mxu0 0.0
        %1495 = vmatprep.subr.mxu0 0.0
        %1496 = vmatpush1.xpose.msra.mxu0 0.0
        %1497 = vmatprep.subr.mxu0 0.0
        %1498 = vmatpush1.xpose.msra.mxu0 0.0
        %1499 = vmatprep.subr.mxu0 0.0
        %1500 = vmatpush1.xpose.msra.mxu0 0.0
        %1501 = vmatprep.subr.mxu0 0.0
        %1502 = vmatpush1.xpose.msra.mxu0 0.0
        %1503 = vmatprep.subr.mxu0 0.0
        %1504 = vmatpush1.xpose.msra.mxu0 0.0
        %1505 = vmatprep.subr.mxu0 0.0
        %1506 = vmatpush1.xpose.msra.mxu0 0.0
        %1507 = vmatprep.subr.mxu0 0.0
        %1508 = vmatpush1.xpose.msra.mxu0 0.0
        %1509 = vmatprep.subr.mxu0 0.0
        %1510 = vmatpush1.xpose.msra.mxu0 0.0
        %1511 = vmatprep.subr.mxu0 0.0
        %1512 = vmatpush1.xpose.msra.mxu0 0.0
        %1513 = vmatprep.subr.mxu0 0.0
        %1514 = vmatpush1.xpose.msra.mxu0 0.0
        %1515 = vmatprep.subr.mxu0 0.0
        %1516 = vmatpush1.xpose.msra.mxu0 0.0
        %1517 = vmatprep.subr.mxu0 0.0
        %1518 = vmatpush1.xpose.msra.mxu0 0.0
        %1519 = vmatprep.subr.mxu0 0.0
        %1520 = vmatpush1.xpose.msra.mxu0 0.0
        %1521 = vmatprep.subr.mxu0 0.0
        %1522 = vmatpush1.xpose.msra.mxu0 0.0
        %1523 = vmatprep.subr.mxu0 0.0
        %1524 = vmatpush1.xpose.msra.mxu0 0.0
        %1525 = vmatprep.subr.mxu0 0.0
        %1526 = vmatpush1.xpose.msra.mxu0 0.0
        %1527 = vmatprep.subr.mxu0 0.0
        %1528 = vmatpush1.xpose.msra.mxu0 0.0
        %1529 = vmatprep.subr.mxu0 0.0
        %1530 = vmatpush1.xpose.msra.mxu0 0.0
        %1531 = vmatprep.subr.mxu0 0.0
        %1532 = vmatpush1.xpose.msra.mxu0 0.0
        %1533 = vmatprep.subr.mxu0 0.0
        %1534 = vmatpush1.xpose.msra.mxu0 0.0
        %1535 = vmatprep.subr.mxu0 0.0
        %1536 = vmatpush1.xpose.msra.mxu0 0.0
        %1537 = vmatprep.subr.mxu0 0.0
        %1538 = vmatpush1.xpose.msra.mxu0 0.0
        %1539 = vmatprep.subr.mxu0 0.0
        %1540 = vmatpush1.xpose.msra.mxu0 0.0
        %1541 = vmatprep.subr.mxu0 0.0
        %1542 = vmatpush1.xpose.msra.mxu0 0.0
        %1543 = vmatprep.subr.mxu0 0.0
        %1544 = vmatpush1.xpose.msra.mxu0 0.0
        %1545 = vmatprep.subr.mxu0 0.0
        %1546 = vmatpush1.xpose.msra.mxu0 0.0
        %1547 = vmatprep.subr.mxu0 0.0
        %1548 = vmatpush1.xpose.msra.mxu0 0.0
        %1549 = vmatprep.subr.mxu0 0.0
        %1550 = vmatpush1.xpose.msra.mxu0 0.0
        %1551 = vmatprep.subr.mxu0 0.0
        %1552 = vmatpush1.xpose.msra.mxu0 0.0
        %1553 = vmatprep.mubr.f32.mxu0 0.0
        %1554 = vmatmul.mubr.f32.gmra.mrb[0].mxu0 %v1485
        %v1555 = vpop.f32.mrb[0].mxu0
        %v1556 = vadd.f32 0.0, %v1555
        %v1557 = vpop.f32.mrb[0].mxu0
        %1558 = vdwg.mxu0
        %v1559 = vsel %vm745, %v1478, -inf
        %1560 = vmax.xlane.f32.xlu0 %v1559
        %v1561 = vpop.xlane.xlu0 %1560
        %v1562 = vsel %vm745, %v1556, -inf
        %1563 = vmax.xlane.f32.xlu0 %v1562
        %v1564 = vpop.xlane.xlu0 %1563
        %v1565 = vsub.f32 %v1478, %v1561
        %v1566 = vsub.f32 %v1556, %v1564
        %v1567 = vmul.f32 %v1565, 1.442695
        %v1568 = vpow.pop %v1567
        %v1569 = vmul.f32 %v1566, 1.442695
        %v1570 = vpow.pop %v1569
        %v1571 = vsel %vm745, %v1568, 0.0
        %1572 = vadd.xlane.f32.xlu0 %v1571
        %v1573 = vpop.xlane.xlu0 %1572
        %v1574 = vsel %vm745, %v1570, 0.0
        %1575 = vadd.xlane.f32.xlu0 %v1574
        %v1576 = vpop.xlane.xlu0 %1575
        %v1577 = vrcp.pop %v1573
        %v1578 = vrcp.pop %v1576
        %v1579 = vmul.f32 %v1568, %v1577
        %v1580 = vmul.f32 %v1570, %v1578
        %1581 = vrot.lane.b32.xlu0 %v732, 48
        %v1582 = vpop.permute.xlu0 %1581
        %v1585 = vsel %vm745, %v1579, 0
        %1587 = vmatprep.subr.mxu0 0.0
        %1588 = vmatpush1.msra.mxu0 %v1582
        %1589 = vmatprep.subr.mxu0 0.0
        %1590 = vmatpush1.msra.mxu0 0.0
        %1591 = vmatprep.subr.mxu0 0.0
        %1592 = vmatpush1.msra.mxu0 0.0
        %1593 = vmatprep.subr.mxu0 0.0
        %1594 = vmatpush1.msra.mxu0 0.0
        %1595 = vmatprep.subr.mxu0 0.0
        %1596 = vmatpush1.msra.mxu0 0.0
        %1597 = vmatprep.subr.mxu0 0.0
        %1598 = vmatpush1.msra.mxu0 0.0
        %1599 = vmatprep.subr.mxu0 0.0
        %1600 = vmatpush1.msra.mxu0 0.0
        %1601 = vmatprep.subr.mxu0 0.0
        %1602 = vmatpush1.msra.mxu0 0.0
        %1603 = vmatprep.subr.mxu0 0.0
        %1604 = vmatpush1.msra.mxu0 0.0
        %1605 = vmatprep.subr.mxu0 0.0
        %1606 = vmatpush1.msra.mxu0 0.0
        %1607 = vmatprep.subr.mxu0 0.0
        %1608 = vmatpush1.msra.mxu0 0.0
        %1609 = vmatprep.subr.mxu0 0.0
        %1610 = vmatpush1.msra.mxu0 0.0
        %1611 = vmatprep.subr.mxu0 0.0
        %1612 = vmatpush1.msra.mxu0 0.0
        %1613 = vmatprep.subr.mxu0 0.0
        %1614 = vmatpush1.msra.mxu0 0.0
        %1615 = vmatprep.subr.mxu0 0.0
        %1616 = vmatpush1.msra.mxu0 0.0
        %1617 = vmatprep.subr.mxu0 0.0
        %1618 = vmatpush1.msra.mxu0 0.0
        %1619 = vmatprep.subr.mxu0 0.0
        %1620 = vmatpush1.msra.mxu0 0.0
        %1621 = vmatprep.subr.mxu0 0.0
        %1622 = vmatpush1.msra.mxu0 0.0
        %1623 = vmatprep.subr.mxu0 0.0
        %1624 = vmatpush1.msra.mxu0 0.0
        %1625 = vmatprep.subr.mxu0 0.0
        %1626 = vmatpush1.msra.mxu0 0.0
        %1627 = vmatprep.subr.mxu0 0.0
        %1628 = vmatpush1.msra.mxu0 0.0
        %1629 = vmatprep.subr.mxu0 0.0
        %1630 = vmatpush1.msra.mxu0 0.0
        %1631 = vmatprep.subr.mxu0 0.0
        %1632 = vmatpush1.msra.mxu0 0.0
        %1633 = vmatprep.subr.mxu0 0.0
        %1634 = vmatpush1.msra.mxu0 0.0
        %1635 = vmatprep.subr.mxu0 0.0
        %1636 = vmatpush1.msra.mxu0 0.0
        %1637 = vmatprep.subr.mxu0 0.0
        %1638 = vmatpush1.msra.mxu0 0.0
        %1639 = vmatprep.subr.mxu0 0.0
        %1640 = vmatpush1.msra.mxu0 0.0
        %1641 = vmatprep.subr.mxu0 0.0
        %1642 = vmatpush1.msra.mxu0 0.0
        %1643 = vmatprep.subr.mxu0 0.0
        %1644 = vmatpush1.msra.mxu0 0.0
        %1645 = vmatprep.subr.mxu0 0.0
        %1646 = vmatpush1.msra.mxu0 0.0
        %1647 = vmatprep.subr.mxu0 0.0
        %1648 = vmatpush1.msra.mxu0 0.0
        %1649 = vmatprep.subr.mxu0 0.0
        %1650 = vmatpush1.msra.mxu0 0.0
        %1651 = vmatprep.mubr.f32.mxu0 0.0
        %1652 = vmatmul.mubr.f32.gmra.mrb[0].mxu0 %v1585
        %v1653 = vpop.f32.mrb[0].mxu0
        %v1654 = vadd.f32 0.0, %v1653
        %v1655 = vpop.f32.mrb[0].mxu0
        %1656 = vdwg.mxu0
        %1657 = vrot.lane.b32.xlu0 %v737, 48
        %v1658 = vpop.permute.xlu0 %1657
        %v1661 = vsel %vm745, %v1580, 0
        %1663 = vmatprep.subr.mxu0 0.0
        %1664 = vmatpush1.msra.mxu0 %v1658
        %1665 = vmatprep.subr.mxu0 0.0
        %1666 = vmatpush1.msra.mxu0 0.0
        %1667 = vmatprep.subr.mxu0 0.0
        %1668 = vmatpush1.msra.mxu0 0.0
        %1669 = vmatprep.subr.mxu0 0.0
        %1670 = vmatpush1.msra.mxu0 0.0
        %1671 = vmatprep.subr.mxu0 0.0
        %1672 = vmatpush1.msra.mxu0 0.0
        %1673 = vmatprep.subr.mxu0 0.0
        %1674 = vmatpush1.msra.mxu0 0.0
        %1675 = vmatprep.subr.mxu0 0.0
        %1676 = vmatpush1.msra.mxu0 0.0
        %1677 = vmatprep.subr.mxu0 0.0
        %1678 = vmatpush1.msra.mxu0 0.0
        %1679 = vmatprep.subr.mxu0 0.0
        %1680 = vmatpush1.msra.mxu0 0.0
        %1681 = vmatprep.subr.mxu0 0.0
        %1682 = vmatpush1.msra.mxu0 0.0
        %1683 = vmatprep.subr.mxu0 0.0
        %1684 = vmatpush1.msra.mxu0 0.0
        %1685 = vmatprep.subr.mxu0 0.0
        %1686 = vmatpush1.msra.mxu0 0.0
        %1687 = vmatprep.subr.mxu0 0.0
        %1688 = vmatpush1.msra.mxu0 0.0
        %1689 = vmatprep.subr.mxu0 0.0
        %1690 = vmatpush1.msra.mxu0 0.0
        %1691 = vmatprep.subr.mxu0 0.0
        %1692 = vmatpush1.msra.mxu0 0.0
        %1693 = vmatprep.subr.mxu0 0.0
        %1694 = vmatpush1.msra.mxu0 0.0
        %1695 = vmatprep.subr.mxu0 0.0
        %1696 = vmatpush1.msra.mxu0 0.0
        %1697 = vmatprep.subr.mxu0 0.0
        %1698 = vmatpush1.msra.mxu0 0.0
        %1699 = vmatprep.subr.mxu0 0.0
        %1700 = vmatpush1.msra.mxu0 0.0
        %1701 = vmatprep.subr.mxu0 0.0
        %1702 = vmatpush1.msra.mxu0 0.0
        %1703 = vmatprep.subr.mxu0 0.0
        %1704 = vmatpush1.msra.mxu0 0.0
        %1705 = vmatprep.subr.mxu0 0.0
        %1706 = vmatpush1.msra.mxu0 0.0
        %1707 = vmatprep.subr.mxu0 0.0
        %1708 = vmatpush1.msra.mxu0 0.0
        %1709 = vmatprep.subr.mxu0 0.0
        %1710 = vmatpush1.msra.mxu0 0.0
        %1711 = vmatprep.subr.mxu0 0.0
        %1712 = vmatpush1.msra.mxu0 0.0
        %1713 = vmatprep.subr.mxu0 0.0
        %1714 = vmatpush1.msra.mxu0 0.0
        %1715 = vmatprep.subr.mxu0 0.0
        %1716 = vmatpush1.msra.mxu0 0.0
        %1717 = vmatprep.subr.mxu0 0.0
        %1718 = vmatpush1.msra.mxu0 0.0
        %1719 = vmatprep.subr.mxu0 0.0
        %1720 = vmatpush1.msra.mxu0 0.0
        %1721 = vmatprep.subr.mxu0 0.0
        %1722 = vmatpush1.msra.mxu0 0.0
        %1723 = vmatprep.subr.mxu0 0.0
        %1724 = vmatpush1.msra.mxu0 0.0
        %1725 = vmatprep.subr.mxu0 0.0
        %1726 = vmatpush1.msra.mxu0 0.0
        %1727 = vmatprep.mubr.f32.mxu0 0.0
        %1728 = vmatmul.mubr.f32.gmra.mrb[0].mxu0 %v1661
        %v1729 = vpop.f32.mrb[0].mxu0
        %v1730 = vadd.f32 0.0, %v1729
        %v1731 = vpop.f32.mrb[0].mxu0
        %1732 = vdwg.mxu0
        %1733 = vrot.lane.b32.xlu0 %v740, 104
        %v1734 = vpop.permute.xlu0 %1733
        %1735 = vrot.lane.b32.xlu0 %v732, 72
        %v1736 = vpop.permute.xlu0 %1735
        %v1737 = vsel %vm745, %v1734, 0
        %v1739 = vsel %vm745, %v1736, 0
        %1741 = vmatprep.subr.mxu0 0.0
        %1742 = vmatpush1.xpose.msra.mxu0 %v1739
        %1743 = vmatprep.subr.mxu0 0.0
        %1744 = vmatpush1.xpose.msra.mxu0 0.0
        %1745 = vmatprep.subr.mxu0 0.0
        %1746 = vmatpush1.xpose.msra.mxu0 0.0
        %1747 = vmatprep.subr.mxu0 0.0
        %1748 = vmatpush1.xpose.msra.mxu0 0.0
        %1749 = vmatprep.subr.mxu0 0.0
        %1750 = vmatpush1.xpose.msra.mxu0 0.0
        %1751 = vmatprep.subr.mxu0 0.0
        %1752 = vmatpush1.xpose.msra.mxu0 0.0
        %1753 = vmatprep.subr.mxu0 0.0
        %1754 = vmatpush1.xpose.msra.mxu0 0.0
        %1755 = vmatprep.subr.mxu0 0.0
        %1756 = vmatpush1.xpose.msra.mxu0 0.0
        %1757 = vmatprep.subr.mxu0 0.0
        %1758 = vmatpush1.xpose.msra.mxu0 0.0
        %1759 = vmatprep.subr.mxu0 0.0
        %1760 = vmatpush1.xpose.msra.mxu0 0.0
        %1761 = vmatprep.subr.mxu0 0.0
        %1762 = vmatpush1.xpose.msra.mxu0 0.0
        %1763 = vmatprep.subr.mxu0 0.0
        %1764 = vmatpush1.xpose.msra.mxu0 0.0
        %1765 = vmatprep.subr.mxu0 0.0
        %1766 = vmatpush1.xpose.msra.mxu0 0.0
        %1767 = vmatprep.subr.mxu0 0.0
        %1768 = vmatpush1.xpose.msra.mxu0 0.0
        %1769 = vmatprep.subr.mxu0 0.0
        %1770 = vmatpush1.xpose.msra.mxu0 0.0
        %1771 = vmatprep.subr.mxu0 0.0
        %1772 = vmatpush1.xpose.msra.mxu0 0.0
        %1773 = vmatprep.subr.mxu0 0.0
        %1774 = vmatpush1.xpose.msra.mxu0 0.0
        %1775 = vmatprep.subr.mxu0 0.0
        %1776 = vmatpush1.xpose.msra.mxu0 0.0
        %1777 = vmatprep.subr.mxu0 0.0
        %1778 = vmatpush1.xpose.msra.mxu0 0.0
        %1779 = vmatprep.subr.mxu0 0.0
        %1780 = vmatpush1.xpose.msra.mxu0 0.0
        %1781 = vmatprep.subr.mxu0 0.0
        %1782 = vmatpush1.xpose.msra.mxu0 0.0
        %1783 = vmatprep.subr.mxu0 0.0
        %1784 = vmatpush1.xpose.msra.mxu0 0.0
        %1785 = vmatprep.subr.mxu0 0.0
        %1786 = vmatpush1.xpose.msra.mxu0 0.0
        %1787 = vmatprep.subr.mxu0 0.0
        %1788 = vmatpush1.xpose.msra.mxu0 0.0
        %1789 = vmatprep.subr.mxu0 0.0
        %1790 = vmatpush1.xpose.msra.mxu0 0.0
        %1791 = vmatprep.subr.mxu0 0.0
        %1792 = vmatpush1.xpose.msra.mxu0 0.0
        %1793 = vmatprep.subr.mxu0 0.0
        %1794 = vmatpush1.xpose.msra.mxu0 0.0
        %1795 = vmatprep.subr.mxu0 0.0
        %1796 = vmatpush1.xpose.msra.mxu0 0.0
        %1797 = vmatprep.subr.mxu0 0.0
        %1798 = vmatpush1.xpose.msra.mxu0 0.0
        %1799 = vmatprep.subr.mxu0 0.0
        %1800 = vmatpush1.xpose.msra.mxu0 0.0
        %1801 = vmatprep.subr.mxu0 0.0
        %1802 = vmatpush1.xpose.msra.mxu0 0.0
        %1803 = vmatprep.subr.mxu0 0.0
        %1804 = vmatpush1.xpose.msra.mxu0 0.0
        %1805 = vmatprep.mubr.f32.mxu0 0.0
        %1806 = vmatmul.mubr.f32.gmra.mrb[0].mxu0 %v1737
        %v1807 = vpop.f32.mrb[0].mxu0
        %v1808 = vadd.f32 0.0, %v1807
        %v1809 = vpop.f32.mrb[0].mxu0
        %1810 = vdwg.mxu0
        %1811 = vrot.lane.b32.xlu0 %v741, 104
        %v1812 = vpop.permute.xlu0 %1811
        %1813 = vrot.lane.b32.xlu0 %v737, 72
        %v1814 = vpop.permute.xlu0 %1813
        %v1815 = vsel %vm745, %v1812, 0
        %v1817 = vsel %vm745, %v1814, 0
        %1819 = vmatprep.subr.mxu0 0.0
        %1820 = vmatpush1.xpose.msra.mxu0 %v1817
        %1821 = vmatprep.subr.mxu0 0.0
        %1822 = vmatpush1.xpose.msra.mxu0 0.0
        %1823 = vmatprep.subr.mxu0 0.0
        %1824 = vmatpush1.xpose.msra.mxu0 0.0
        %1825 = vmatprep.subr.mxu0 0.0
        %1826 = vmatpush1.xpose.msra.mxu0 0.0
        %1827 = vmatprep.subr.mxu0 0.0
        %1828 = vmatpush1.xpose.msra.mxu0 0.0
        %1829 = vmatprep.subr.mxu0 0.0
        %1830 = vmatpush1.xpose.msra.mxu0 0.0
        %1831 = vmatprep.subr.mxu0 0.0
        %1832 = vmatpush1.xpose.msra.mxu0 0.0
        %1833 = vmatprep.subr.mxu0 0.0
        %1834 = vmatpush1.xpose.msra.mxu0 0.0
        %1835 = vmatprep.subr.mxu0 0.0
        %1836 = vmatpush1.xpose.msra.mxu0 0.0
        %1837 = vmatprep.subr.mxu0 0.0
        %1838 = vmatpush1.xpose.msra.mxu0 0.0
        %1839 = vmatprep.subr.mxu0 0.0
        %1840 = vmatpush1.xpose.msra.mxu0 0.0
        %1841 = vmatprep.subr.mxu0 0.0
        %1842 = vmatpush1.xpose.msra.mxu0 0.0
        %1843 = vmatprep.subr.mxu0 0.0
        %1844 = vmatpush1.xpose.msra.mxu0 0.0
        %1845 = vmatprep.subr.mxu0 0.0
        %1846 = vmatpush1.xpose.msra.mxu0 0.0
        %1847 = vmatprep.subr.mxu0 0.0
        %1848 = vmatpush1.xpose.msra.mxu0 0.0
        %1849 = vmatprep.subr.mxu0 0.0
        %1850 = vmatpush1.xpose.msra.mxu0 0.0
        %1851 = vmatprep.subr.mxu0 0.0
        %1852 = vmatpush1.xpose.msra.mxu0 0.0
        %1853 = vmatprep.subr.mxu0 0.0
        %1854 = vmatpush1.xpose.msra.mxu0 0.0
        %1855 = vmatprep.subr.mxu0 0.0
        %1856 = vmatpush1.xpose.msra.mxu0 0.0
        %1857 = vmatprep.subr.mxu0 0.0
        %1858 = vmatpush1.xpose.msra.mxu0 0.0
        %1859 = vmatprep.subr.mxu0 0.0
        %1860 = vmatpush1.xpose.msra.mxu0 0.0
        %1861 = vmatprep.subr.mxu0 0.0
        %1862 = vmatpush1.xpose.msra.mxu0 0.0
        %1863 = vmatprep.subr.mxu0 0.0
        %1864 = vmatpush1.xpose.msra.mxu0 0.0
        %1865 = vmatprep.subr.mxu0 0.0
        %1866 = vmatpush1.xpose.msra.mxu0 0.0
        %1867 = vmatprep.subr.mxu0 0.0
        %1868 = vmatpush1.xpose.msra.mxu0 0.0
        %1869 = vmatprep.subr.mxu0 0.0
        %1870 = vmatpush1.xpose.msra.mxu0 0.0
        %1871 = vmatprep.subr.mxu0 0.0
        %1872 = vmatpush1.xpose.msra.mxu0 0.0
        %1873 = vmatprep.subr.mxu0 0.0
        %1874 = vmatpush1.xpose.msra.mxu0 0.0
        %1875 = vmatprep.subr.mxu0 0.0
        %1876 = vmatpush1.xpose.msra.mxu0 0.0
        %1877 = vmatprep.subr.mxu0 0.0
        %1878 = vmatpush1.xpose.msra.mxu0 0.0
        %1879 = vmatprep.subr.mxu0 0.0
        %1880 = vmatpush1.xpose.msra.mxu0 0.0
        %1881 = vmatprep.subr.mxu0 0.0
        %1882 = vmatpush1.xpose.msra.mxu0 0.0
        %1883 = vmatprep.mubr.f32.mxu0 0.0
        %1884 = vmatmul.mubr.f32.gmra.mrb[0].mxu0 %v1815
        %v1885 = vpop.f32.mrb[0].mxu0
        %v1886 = vadd.f32 0.0, %v1885
        %v1887 = vpop.f32.mrb[0].mxu0
        %1888 = vdwg.mxu0
        %v1889 = vsel %vm745, %v1808, -inf
        %1890 = vmax.xlane.f32.xlu0 %v1889
        %v1891 = vpop.xlane.xlu0 %1890
        %v1892 = vsel %vm745, %v1886, -inf
        %1893 = vmax.xlane.f32.xlu0 %v1892
        %v1894 = vpop.xlane.xlu0 %1893
        %v1895 = vsub.f32 %v1808, %v1891
        %v1896 = vsub.f32 %v1886, %v1894
        %v1897 = vmul.f32 %v1895, 1.442695
        %v1898 = vpow.pop %v1897
        %v1899 = vmul.f32 %v1896, 1.442695
        %v1900 = vpow.pop %v1899
        %v1901 = vsel %vm745, %v1898, 0.0
        %1902 = vadd.xlane.f32.xlu0 %v1901
        %v1903 = vpop.xlane.xlu0 %1902
        %v1904 = vsel %vm745, %v1900, 0.0
        %1905 = vadd.xlane.f32.xlu0 %v1904
        %v1906 = vpop.xlane.xlu0 %1905
        %v1907 = vrcp.pop %v1903
        %v1908 = vrcp.pop %v1906
        %v1909 = vmul.f32 %v1898, %v1907
        %v1910 = vmul.f32 %v1900, %v1908
        %1911 = vrot.lane.b32.xlu0 %v732, 40
        %v1912 = vpop.permute.xlu0 %1911
        %v1915 = vsel %vm745, %v1909, 0
        %1917 = vmatprep.subr.mxu0 0.0
        %1918 = vmatpush1.msra.mxu0 %v1912
        %1919 = vmatprep.subr.mxu0 0.0
        %1920 = vmatpush1.msra.mxu0 0.0
        %1921 = vmatprep.subr.mxu0 0.0
        %1922 = vmatpush1.msra.mxu0 0.0
        %1923 = vmatprep.subr.mxu0 0.0
        %1924 = vmatpush1.msra.mxu0 0.0
        %1925 = vmatprep.subr.mxu0 0.0
        %1926 = vmatpush1.msra.mxu0 0.0
        %1927 = vmatprep.subr.mxu0 0.0
        %1928 = vmatpush1.msra.mxu0 0.0
        %1929 = vmatprep.subr.mxu0 0.0
        %1930 = vmatpush1.msra.mxu0 0.0
        %1931 = vmatprep.subr.mxu0 0.0
        %1932 = vmatpush1.msra.mxu0 0.0
        %1933 = vmatprep.subr.mxu0 0.0
        %1934 = vmatpush1.msra.mxu0 0.0
        %1935 = vmatprep.subr.mxu0 0.0
        %1936 = vmatpush1.msra.mxu0 0.0
        %1937 = vmatprep.subr.mxu0 0.0
        %1938 = vmatpush1.msra.mxu0 0.0
        %1939 = vmatprep.subr.mxu0 0.0
        %1940 = vmatpush1.msra.mxu0 0.0
        %1941 = vmatprep.subr.mxu0 0.0
        %1942 = vmatpush1.msra.mxu0 0.0
        %1943 = vmatprep.subr.mxu0 0.0
        %1944 = vmatpush1.msra.mxu0 0.0
        %1945 = vmatprep.subr.mxu0 0.0
        %1946 = vmatpush1.msra.mxu0 0.0
        %1947 = vmatprep.subr.mxu0 0.0
        %1948 = vmatpush1.msra.mxu0 0.0
        %1949 = vmatprep.subr.mxu0 0.0
        %1950 = vmatpush1.msra.mxu0 0.0
        %1951 = vmatprep.subr.mxu0 0.0
        %1952 = vmatpush1.msra.mxu0 0.0
        %1953 = vmatprep.subr.mxu0 0.0
        %1954 = vmatpush1.msra.mxu0 0.0
        %1955 = vmatprep.subr.mxu0 0.0
        %1956 = vmatpush1.msra.mxu0 0.0
        %1957 = vmatprep.subr.mxu0 0.0
        %1958 = vmatpush1.msra.mxu0 0.0
        %1959 = vmatprep.subr.mxu0 0.0
        %1960 = vmatpush1.msra.mxu0 0.0
        %1961 = vmatprep.subr.mxu0 0.0
        %1962 = vmatpush1.msra.mxu0 0.0
        %1963 = vmatprep.subr.mxu0 0.0
        %1964 = vmatpush1.msra.mxu0 0.0
        %1965 = vmatprep.subr.mxu0 0.0
        %1966 = vmatpush1.msra.mxu0 0.0
        %1967 = vmatprep.subr.mxu0 0.0
        %1968 = vmatpush1.msra.mxu0 0.0
        %1969 = vmatprep.subr.mxu0 0.0
        %1970 = vmatpush1.msra.mxu0 0.0
        %1971 = vmatprep.subr.mxu0 0.0
        %1972 = vmatpush1.msra.mxu0 0.0
        %1973 = vmatprep.subr.mxu0 0.0
        %1974 = vmatpush1.msra.mxu0 0.0
        %1975 = vmatprep.subr.mxu0 0.0
        %1976 = vmatpush1.msra.mxu0 0.0
        %1977 = vmatprep.subr.mxu0 0.0
        %1978 = vmatpush1.msra.mxu0 0.0
        %1979 = vmatprep.subr.mxu0 0.0
        %1980 = vmatpush1.msra.mxu0 0.0
        %1981 = vmatprep.mubr.f32.mxu0 0.0
        %1982 = vmatmul.mubr.f32.gmra.mrb[0].mxu0 %v1915
        %v1983 = vpop.f32.mrb[0].mxu0
        %v1984 = vadd.f32 0.0, %v1983
        %v1985 = vpop.f32.mrb[0].mxu0
        %1986 = vdwg.mxu0
        %1987 = vrot.lane.b32.xlu0 %v737, 40
        %v1988 = vpop.permute.xlu0 %1987
        %v1991 = vsel %vm745, %v1910, 0
        %1993 = vmatprep.subr.mxu0 0.0
        %1994 = vmatpush1.msra.mxu0 %v1988
        %1995 = vmatprep.subr.mxu0 0.0
        %1996 = vmatpush1.msra.mxu0 0.0
        %1997 = vmatprep.subr.mxu0 0.0
        %1998 = vmatpush1.msra.mxu0 0.0
        %1999 = vmatprep.subr.mxu0 0.0
        %2000 = vmatpush1.msra.mxu0 0.0
        %2001 = vmatprep.subr.mxu0 0.0
        %2002 = vmatpush1.msra.mxu0 0.0
        %2003 = vmatprep.subr.mxu0 0.0
        %2004 = vmatpush1.msra.mxu0 0.0
        %2005 = vmatprep.subr.mxu0 0.0
        %2006 = vmatpush1.msra.mxu0 0.0
        %2007 = vmatprep.subr.mxu0 0.0
        %2008 = vmatpush1.msra.mxu0 0.0
        %2009 = vmatprep.subr.mxu0 0.0
        %2010 = vmatpush1.msra.mxu0 0.0
        %2011 = vmatprep.subr.mxu0 0.0
        %2012 = vmatpush1.msra.mxu0 0.0
        %2013 = vmatprep.subr.mxu0 0.0
        %2014 = vmatpush1.msra.mxu0 0.0
        %2015 = vmatprep.subr.mxu0 0.0
        %2016 = vmatpush1.msra.mxu0 0.0
        %2017 = vmatprep.subr.mxu0 0.0
        %2018 = vmatpush1.msra.mxu0 0.0
        %2019 = vmatprep.subr.mxu0 0.0
        %2020 = vmatpush1.msra.mxu0 0.0
        %2021 = vmatprep.subr.mxu0 0.0
        %2022 = vmatpush1.msra.mxu0 0.0
        %2023 = vmatprep.subr.mxu0 0.0
        %2024 = vmatpush1.msra.mxu0 0.0
        %2025 = vmatprep.subr.mxu0 0.0
        %2026 = vmatpush1.msra.mxu0 0.0
        %2027 = vmatprep.subr.mxu0 0.0
        %2028 = vmatpush1.msra.mxu0 0.0
        %2029 = vmatprep.subr.mxu0 0.0
        %2030 = vmatpush1.msra.mxu0 0.0
        %2031 = vmatprep.subr.mxu0 0.0
        %2032 = vmatpush1.msra.mxu0 0.0
        %2033 = vmatprep.subr.mxu0 0.0
        %2034 = vmatpush1.msra.mxu0 0.0
        %2035 = vmatprep.subr.mxu0 0.0
        %2036 = vmatpush1.msra.mxu0 0.0
        %2037 = vmatprep.subr.mxu0 0.0
        %2038 = vmatpush1.msra.mxu0 0.0
        %2039 = vmatprep.subr.mxu0 0.0
        %2040 = vmatpush1.msra.mxu0 0.0
        %2041 = vmatprep.subr.mxu0 0.0
        %2042 = vmatpush1.msra.mxu0 0.0
        %2043 = vmatprep.subr.mxu0 0.0
        %2044 = vmatpush1.msra.mxu0 0.0
        %2045 = vmatprep.subr.mxu0 0.0
        %2046 = vmatpush1.msra.mxu0 0.0
        %2047 = vmatprep.subr.mxu0 0.0
        %2048 = vmatpush1.msra.mxu0 0.0
        %2049 = vmatprep.subr.mxu0 0.0
        %2050 = vmatpush1.msra.mxu0 0.0
        %2051 = vmatprep.subr.mxu0 0.0
        %2052 = vmatpush1.msra.mxu0 0.0
        %2053 = vmatprep.subr.mxu0 0.0
        %2054 = vmatpush1.msra.mxu0 0.0
        %2055 = vmatprep.subr.mxu0 0.0
        %2056 = vmatpush1.msra.mxu0 0.0
        %2057 = vmatprep.mubr.f32.mxu0 0.0
        %2058 = vmatmul.mubr.f32.gmra.mrb[0].mxu0 %v1991
        %v2059 = vpop.f32.mrb[0].mxu0
        %v2060 = vadd.f32 0.0, %v2059
        %v2061 = vpop.f32.mrb[0].mxu0
        %2062 = vdwg.mxu0
        %2065 = vrot.lane.b32.xlu0 %v1324, 8
        %v2066 = vpop.permute.xlu0 %2065
        %2067 = vrot.lane.b32.xlu0 %v1400, 8
        %v2068 = vpop.permute.xlu0 %2067
        %2073 = vrot.lane.b32.xlu0 %v1654, 16
        %v2074 = vpop.permute.xlu0 %2073
        %2075 = vrot.lane.b32.xlu0 %v1730, 16
        %v2076 = vpop.permute.xlu0 %2075
        %2081 = vrot.lane.b32.xlu0 %v1984, 24
        %v2082 = vpop.permute.xlu0 %2081
        %2083 = vrot.lane.b32.xlu0 %v2060, 24
        %v2084 = vpop.permute.xlu0 %2083
        %v2087 = vsel %vm745, %v994, %v2066
        %v2088 = vsel %vm745, %v1070, %v2068
        %vm2089 = vcmask 130048
        %v2090 = vsel %vm2089, %v2087, %v2074
        %v2091 = vsel %vm2089, %v2088, %v2076
        %vm2092 = vcmask 195584
        %v2093 = vsel %vm2092, %v2090, %v2082
        %v2094 = vsel %vm2092, %v2091, %v2084
        %v2095 = vld [vmem:[%s571] sm:$0xff]
        %v2096 = vld [vmem:[%s571 + $0x8] sm:$0xff]
        %v2097 = vld [vmem:[%s571 + $0x10] sm:$0xff]
        %v2098 = vld [vmem:[%s571 + $0x18] sm:$0xff]
        %v2099 = vld [vmem:[%s574] sm:$0x1]
        %v2101 = vlaneseq
        %v2102 = vshrl.u32 %v2101, 7
        %v2103 = vsub.s32 0, %v2102
        %v2104 = vrot.slane %v2099, %v2103
        %v2107 = vsel %vm611, %v2093, 0
        %v2110 = vsel %vm611, %v2094, 0
        %2112 = vmatprep.subr.mxu0 0.0
        %2113 = vmatpush1.msra.mxu0 %v2095
        %2114 = vmatprep.subr.mxu0 0.0
        %2115 = vmatpush1.msra.mxu0 %v2096
        %2116 = vmatprep.subr.mxu0 0.0
        %2117 = vmatpush1.msra.mxu0 %v2097
        %2118 = vmatprep.subr.mxu0 0.0
        %2119 = vmatpush1.msra.mxu0 %v2098
        %2120 = vmatprep.subr.mxu0 0.0
        %2121 = vmatpush1.msra.mxu0 0.0
        %2122 = vmatprep.subr.mxu0 0.0
        %2123 = vmatpush1.msra.mxu0 0.0
        %2124 = vmatprep.subr.mxu0 0.0
        %2125 = vmatpush1.msra.mxu0 0.0
        %2126 = vmatprep.subr.mxu0 0.0
        %2127 = vmatpush1.msra.mxu0 0.0
        %2128 = vmatprep.subr.mxu0 0.0
        %2129 = vmatpush1.msra.mxu0 0.0
        %2130 = vmatprep.subr.mxu0 0.0
        %2131 = vmatpush1.msra.mxu0 0.0
        %2132 = vmatprep.subr.mxu0 0.0
        %2133 = vmatpush1.msra.mxu0 0.0
        %2134 = vmatprep.subr.mxu0 0.0
        %2135 = vmatpush1.msra.mxu0 0.0
        %2136 = vmatprep.subr.mxu0 0.0
        %2137 = vmatpush1.msra.mxu0 0.0
        %2138 = vmatprep.subr.mxu0 0.0
        %2139 = vmatpush1.msra.mxu0 0.0
        %2140 = vmatprep.subr.mxu0 0.0
        %2141 = vmatpush1.msra.mxu0 0.0
        %2142 = vmatprep.subr.mxu0 0.0
        %2143 = vmatpush1.msra.mxu0 0.0
        %2144 = vmatprep.subr.mxu0 0.0
        %2145 = vmatpush1.msra.mxu0 0.0
        %2146 = vmatprep.subr.mxu0 0.0
        %2147 = vmatpush1.msra.mxu0 0.0
        %2148 = vmatprep.subr.mxu0 0.0
        %2149 = vmatpush1.msra.mxu0 0.0
        %2150 = vmatprep.subr.mxu0 0.0
        %2151 = vmatpush1.msra.mxu0 0.0
        %2152 = vmatprep.subr.mxu0 0.0
        %2153 = vmatpush1.msra.mxu0 0.0
        %2154 = vmatprep.subr.mxu0 0.0
        %2155 = vmatpush1.msra.mxu0 0.0
        %2156 = vmatprep.subr.mxu0 0.0
        %2157 = vmatpush1.msra.mxu0 0.0
        %2158 = vmatprep.subr.mxu0 0.0
        %2159 = vmatpush1.msra.mxu0 0.0
        %2160 = vmatprep.subr.mxu0 0.0
        %2161 = vmatpush1.msra.mxu0 0.0
        %2162 = vmatprep.subr.mxu0 0.0
        %2163 = vmatpush1.msra.mxu0 0.0
        %2164 = vmatprep.subr.mxu0 0.0
        %2165 = vmatpush1.msra.mxu0 0.0
        %2166 = vmatprep.subr.mxu0 0.0
        %2167 = vmatpush1.msra.mxu0 0.0
        %2168 = vmatprep.subr.mxu0 0.0
        %2169 = vmatpush1.msra.mxu0 0.0
        %2170 = vmatprep.subr.mxu0 0.0
        %2171 = vmatpush1.msra.mxu0 0.0
        %2172 = vmatprep.subr.mxu0 0.0
        %2173 = vmatpush1.msra.mxu0 0.0
        %2174 = vmatprep.subr.mxu0 0.0
        %2175 = vmatpush1.msra.mxu0 0.0
        %2176 = vmatprep.mubr.f32.mxu0 0.0
        %2177 = vmatmul.mubr.f32.gmra.mrb[0].mxu0 %v2107
        %v2178 = vpop.f32.mrb[0].mxu0
        %v2179 = vadd.f32 %v2104, %v2178
        %v2180 = vpop.f32.mrb[0].mxu0
        %2181 = vmatprep.mubr.f32.mxu0 0.0
        %2182 = vmatmul.mubr.f32.gmra.mrb[0].mxu0 %v2110
        %v2183 = vpop.f32.mrb[0].mxu0
        %v2184 = vadd.f32 %v2104, %v2183
        %v2185 = vpop.f32.mrb[0].mxu0
        %2186 = vdwg.mxu0
        %v2187 = vadd.f32 %v607, %v2179
        %v2188 = vadd.f32 %v608, %v2184
        %v2189 = vld [vmem:[%s577] sm:$0x1]
        %v2190 = vld [vmem:[%s580] sm:$0x1]
        %v2191 = vsel %vm611, %v2187, 0.0
        %2192 = vadd.xlane.f32.xlu0 %v2191
        %v2193 = vpop.xlane.xlu0 %2192
        %v2194 = vsel %vm611, %v2188, 0.0
        %2195 = vadd.xlane.f32.xlu0 %v2194
        %v2196 = vpop.xlane.xlu0 %2195
        %v2197 = vmul.f32 %v2193, %v618
        %v2198 = vmul.f32 %v2196, %v618
        %v2199 = vsub.f32 %v2187, %v2197
        %v2200 = vsub.f32 %v2188, %v2198
        %v2201 = vmul.f32 %v2199, %v2199
        %v2202 = vmul.f32 %v2200, %v2200
        %v2203 = vsel %vm611, %v2201, 0.0
        %2204 = vadd.xlane.f32.xlu0 %v2203
        %v2205 = vpop.xlane.xlu0 %2204
        %v2206 = vsel %vm611, %v2202, 0.0
        %2207 = vadd.xlane.f32.xlu0 %v2206
        %v2208 = vpop.xlane.xlu0 %2207
        %v2209 = vmul.f32 %v2205, %v618
        %v2210 = vmul.f32 %v2208, %v618
        %v2211 = vadd.f32 %v2209, 1e-05
        %v2212 = vadd.f32 %v2210, 1e-05
        %v2213 = vrsqrt.pop %v2211
        %v2214 = vrsqrt.pop %v2212
        %v2215 = vmul.f32 %v2199, %v2213
        %v2216 = vmul.f32 %v2200, %v2214
        %v2218 = vlaneseq
        %v2219 = vshrl.u32 %v2218, 7
        %v2220 = vsub.s32 0, %v2219
        %v2221 = vrot.slane %v2189, %v2220
        %v2223 = vmul.f32 %v2215, %v2221
        %v2224 = vmul.f32 %v2216, %v2221
        %v2226 = vlaneseq
        %v2227 = vshrl.u32 %v2226, 7
        %v2228 = vsub.s32 0, %v2227
        %v2229 = vrot.slane %v2190, %v2228
        %v2231 = vadd.f32 %v2223, %v2229
        %v2232 = vadd.f32 %v2224, %v2229
        %v2233 = vld [vmem:[%s585] sm:$0xff]
        %v2234 = vld [vmem:[%s585 + $0x8] sm:$0xff]
        %v2235 = vld [vmem:[%s585 + $0x10] sm:$0xff]
        %v2236 = vld [vmem:[%s585 + $0x18] sm:$0xff]
        %v2237 = vld [vmem:[%s588] sm:$0x1]
        %v2239 = vlaneseq
        %v2240 = vshrl.u32 %v2239, 7
        %v2241 = vsub.s32 0, %v2240
        %v2242 = vrot.slane %v2237, %v2241
        %v2245 = vsel %vm611, %v2231, 0
        %v2248 = vsel %vm611, %v2232, 0
        %2250 = vmatprep.subr.mxu0 0.0
        %2251 = vmatpush1.msra.mxu0 %v2233
        %2252 = vmatprep.subr.mxu0 0.0
        %2253 = vmatpush1.msra.mxu0 %v2234
        %2254 = vmatprep.subr.mxu0 0.0
        %2255 = vmatpush1.msra.mxu0 %v2235
        %2256 = vmatprep.subr.mxu0 0.0
        %2257 = vmatpush1.msra.mxu0 %v2236
        %2258 = vmatprep.subr.mxu0 0.0
        %2259 = vmatpush1.msra.mxu0 0.0
        %2260 = vmatprep.subr.mxu0 0.0
        %2261 = vmatpush1.msra.mxu0 0.0
        %2262 = vmatprep.subr.mxu0 0.0
        %2263 = vmatpush1.msra.mxu0 0.0
        %2264 = vmatprep.subr.mxu0 0.0
        %2265 = vmatpush1.msra.mxu0 0.0
        %2266 = vmatprep.subr.mxu0 0.0
        %2267 = vmatpush1.msra.mxu0 0.0
        %2268 = vmatprep.subr.mxu0 0.0
        %2269 = vmatpush1.msra.mxu0 0.0
        %2270 = vmatprep.subr.mxu0 0.0
        %2271 = vmatpush1.msra.mxu0 0.0
        %2272 = vmatprep.subr.mxu0 0.0
        %2273 = vmatpush1.msra.mxu0 0.0
        %2274 = vmatprep.subr.mxu0 0.0
        %2275 = vmatpush1.msra.mxu0 0.0
        %2276 = vmatprep.subr.mxu0 0.0
        %2277 = vmatpush1.msra.mxu0 0.0
        %2278 = vmatprep.subr.mxu0 0.0
        %2279 = vmatpush1.msra.mxu0 0.0
        %2280 = vmatprep.subr.mxu0 0.0
        %2281 = vmatpush1.msra.mxu0 0.0
        %2282 = vmatprep.subr.mxu0 0.0
        %2283 = vmatpush1.msra.mxu0 0.0
        %2284 = vmatprep.subr.mxu0 0.0
        %2285 = vmatpush1.msra.mxu0 0.0
        %2286 = vmatprep.subr.mxu0 0.0
        %2287 = vmatpush1.msra.mxu0 0.0
        %2288 = vmatprep.subr.mxu0 0.0
        %2289 = vmatpush1.msra.mxu0 0.0
        %2290 = vmatprep.subr.mxu0 0.0
        %2291 = vmatpush1.msra.mxu0 0.0
        %2292 = vmatprep.subr.mxu0 0.0
        %2293 = vmatpush1.msra.mxu0 0.0
        %2294 = vmatprep.subr.mxu0 0.0
        %2295 = vmatpush1.msra.mxu0 0.0
        %2296 = vmatprep.subr.mxu0 0.0
        %2297 = vmatpush1.msra.mxu0 0.0
        %2298 = vmatprep.subr.mxu0 0.0
        %2299 = vmatpush1.msra.mxu0 0.0
        %2300 = vmatprep.subr.mxu0 0.0
        %2301 = vmatpush1.msra.mxu0 0.0
        %2302 = vmatprep.subr.mxu0 0.0
        %2303 = vmatpush1.msra.mxu0 0.0
        %2304 = vmatprep.subr.mxu0 0.0
        %2305 = vmatpush1.msra.mxu0 0.0
        %2306 = vmatprep.subr.mxu0 0.0
        %2307 = vmatpush1.msra.mxu0 0.0
        %2308 = vmatprep.subr.mxu0 0.0
        %2309 = vmatpush1.msra.mxu0 0.0
        %2310 = vmatprep.subr.mxu0 0.0
        %2311 = vmatpush1.msra.mxu0 0.0
        %2312 = vmatprep.subr.mxu0 0.0
        %2313 = vmatpush1.msra.mxu0 0.0
        %2314 = vmatprep.mubr.f32.mxu0 0.0
        %2315 = vmatmul.mubr.f32.gmra.mrb[0].mxu0 %v2245
        %v2316 = vpop.f32.mrb[0].mxu0
        %v2317 = vadd.f32 %v2242, %v2316
        %v2318 = vpop.f32.mrb[0].mxu0
        %2319 = vmatprep.mubr.f32.mxu0 0.0
        %2320 = vmatmul.mubr.f32.gmra.mrb[0].mxu0 %v2248
        %v2321 = vpop.f32.mrb[0].mxu0
        %v2322 = vadd.f32 %v2242, %v2321
        %v2323 = vpop.f32.mrb[0].mxu0
        %2324 = vdwg.mxu0
        %v2325 = vmul.f32 %v2317, 0.5
        %v2326 = vmul.f32 %v2322, 0.5
        %v2327 = vmul.f32 %v2317, 0.044715
        %v2328 = vmul.f32 %v2322, 0.044715
        %v2329 = vmul.f32 %v2327, %v2317
        %v2330 = vmul.f32 %v2328, %v2322
        %v2331 = vmul.f32 %v2329, %v2317
        %v2332 = vmul.f32 %v2330, %v2322
        %v2333 = vadd.f32 %v2317, %v2331
        %v2334 = vadd.f32 %v2322, %v2332
        %v2335 = vmul.f32 %v2333, 0.7978846
        %v2336 = vmul.f32 %v2334, 0.7978846
        %v2337 = vtanh.pop %v2335
        %v2338 = vtanh.pop %v2336
        %v2339 = vadd.f32 %v2337, 1.0
        %v2340 = vadd.f32 %v2338, 1.0
        %v2341 = vmul.f32 %v2325, %v2339
        %v2342 = vmul.f32 %v2326, %v2340
        %v2343 = vld [vmem:[%s593] sm:$0xff]
        %v2344 = vld [vmem:[%s593 + $0x8] sm:$0xff]
        %v2345 = vld [vmem:[%s593 + $0x10] sm:$0xff]
        %v2346 = vld [vmem:[%s593 + $0x18] sm:$0xff]
        %v2347 = vld [vmem:[%s593 + $0x20] sm:$0xff]
        %v2348 = vld [vmem:[%s593 + $0x28] sm:$0xff]
        %v2349 = vld [vmem:[%s593 + $0x30] sm:$0xff]
        %v2350 = vld [vmem:[%s593 + $0x38] sm:$0xff]
        %v2351 = vld [vmem:[%s596] sm:$0x1]
        %v2353 = vlaneseq
        %v2354 = vshrl.u32 %v2353, 7
        %v2355 = vsub.s32 0, %v2354
        %v2356 = vrot.slane %v2351, %v2355
        %vm2358 = vcmask 523264
        %v2360 = vsel %vm2358, %v2341, 0
        %v2363 = vsel %vm2358, %v2342, 0
        %2365 = vmatprep.subr.mxu0 0.0
        %2366 = vmatpush1.msra.mxu0 %v2343
        %2367 = vmatprep.subr.mxu0 0.0
        %2368 = vmatpush1.msra.mxu0 %v2344
        %2369 = vmatprep.subr.mxu0 0.0
        %2370 = vmatpush1.msra.mxu0 %v2345
        %2371 = vmatprep.subr.mxu0 0.0
        %2372 = vmatpush1.msra.mxu0 %v2346
        %2373 = vmatprep.subr.mxu0 0.0
        %2374 = vmatpush1.msra.mxu0 %v2347
        %2375 = vmatprep.subr.mxu0 0.0
        %2376 = vmatpush1.msra.mxu0 %v2348
        %2377 = vmatprep.subr.mxu0 0.0
        %2378 = vmatpush1.msra.mxu0 %v2349
        %2379 = vmatprep.subr.mxu0 0.0
        %2380 = vmatpush1.msra.mxu0 %v2350
        %2381 = vmatprep.subr.mxu0 0.0
        %2382 = vmatpush1.msra.mxu0 0.0
        %2383 = vmatprep.subr.mxu0 0.0
        %2384 = vmatpush1.msra.mxu0 0.0
        %2385 = vmatprep.subr.mxu0 0.0
        %2386 = vmatpush1.msra.mxu0 0.0
        %2387 = vmatprep.subr.mxu0 0.0
        %2388 = vmatpush1.msra.mxu0 0.0
        %2389 = vmatprep.subr.mxu0 0.0
        %2390 = vmatpush1.msra.mxu0 0.0
        %2391 = vmatprep.subr.mxu0 0.0
        %2392 = vmatpush1.msra.mxu0 0.0
        %2393 = vmatprep.subr.mxu0 0.0
        %2394 = vmatpush1.msra.mxu0 0.0
        %2395 = vmatprep.subr.mxu0 0.0
        %2396 = vmatpush1.msra.mxu0 0.0
        %2397 = vmatprep.subr.mxu0 0.0
        %2398 = vmatpush1.msra.mxu0 0.0
        %2399 = vmatprep.subr.mxu0 0.0
        %2400 = vmatpush1.msra.mxu0 0.0
        %2401 = vmatprep.subr.mxu0 0.0
        %2402 = vmatpush1.msra.mxu0 0.0
        %2403 = vmatprep.subr.mxu0 0.0
        %2404 = vmatpush1.msra.mxu0 0.0
        %2405 = vmatprep.subr.mxu0 0.0
        %2406 = vmatpush1.msra.mxu0 0.0
        %2407 = vmatprep.subr.mxu0 0.0
        %2408 = vmatpush1.msra.mxu0 0.0
        %2409 = vmatprep.subr.mxu0 0.0
        %2410 = vmatpush1.msra.mxu0 0.0
        %2411 = vmatprep.subr.mxu0 0.0
        %2412 = vmatpush1.msra.mxu0 0.0
        %2413 = vmatprep.subr.mxu0 0.0
        %2414 = vmatpush1.msra.mxu0 0.0
        %2415 = vmatprep.subr.mxu0 0.0
        %2416 = vmatpush1.msra.mxu0 0.0
        %2417 = vmatprep.subr.mxu0 0.0
        %2418 = vmatpush1.msra.mxu0 0.0
        %2419 = vmatprep.subr.mxu0 0.0
        %2420 = vmatpush1.msra.mxu0 0.0
        %2421 = vmatprep.subr.mxu0 0.0
        %2422 = vmatpush1.msra.mxu0 0.0
        %2423 = vmatprep.subr.mxu0 0.0
        %2424 = vmatpush1.msra.mxu0 0.0
        %2425 = vmatprep.subr.mxu0 0.0
        %2426 = vmatpush1.msra.mxu0 0.0
        %2427 = vmatprep.subr.mxu0 0.0
        %2428 = vmatpush1.msra.mxu0 0.0
        %2429 = vmatprep.mubr.f32.mxu0 0.0
        %2430 = vmatmul.mubr.f32.gmra.mrb[0].mxu0 %v2360
        %v2431 = vpop.f32.mrb[0].mxu0
        %v2432 = vadd.f32 %v2356, %v2431
        %v2433 = vpop.f32.mrb[0].mxu0
        %2434 = vmatprep.mubr.f32.mxu0 0.0
        %2435 = vmatmul.mubr.f32.gmra.mrb[0].mxu0 %v2363
        %v2436 = vpop.f32.mrb[0].mxu0
        %v2437 = vadd.f32 %v2356, %v2436
        %v2438 = vpop.f32.mrb[0].mxu0
        %2439 = vdwg.mxu0
        %v2440 = vadd.f32 %v2187, %v2432
        %v2441 = vadd.f32 %v2188, %v2437
        %2442 = vst.msk [vmem:[#allocation2] sm:$0xff] %vm611, %v2440
        %2443 = vst.msk [vmem:[#allocation2 + $0x8] sm:$0xff] %vm611, %v2441
        %2444 = vst.msk [vmem:[#allocation3] sm:$0xff] %vm611, %v2440
        %2445 = vst.msk [vmem:[#allocation3 + $0x8] sm:$0xff] %vm611, %v2441
        // Predicated region
        $region73: #{temporal_transformer_all.1} parent=67 // pred_check
          %p2446 = pneg %p366
        $region74: #{temporal_transformer_all.1} parent=67 // pred_check_branch
          %2448 = sbr.rel (%p2446) target = $region76
        $region75: #{temporal_transformer_all.1} parent=67 // pred_region
          %s2449 = smul.u32 2, %s28
          %s2451 = ssub.s32 256, 256
          %2452 = vsyncadd [#allocation4], %s2451
          %s2453 = smul.addr %s2449, 128
          %s2454 = scalar_lea.hbm %s12, %s2453
          %s2455 = sshll.u32 [#allocation3], 4
          %s2456 = int_to_ptr.vmem [resolvable:$true] %s2455
          %2461 = dma.vmem_to_hbm [thread:$0]  %s2456, 256, %s2454, [#allocation4], 128, 128, 8
        $region76: #{temporal_transformer_all.1} parent=67 // pred_fallthru
          _
        // Predicated region
        $region77: #{temporal_transformer_all.1} parent=67 // pred_check
          %p2462 = pneg %p366
        $region78: #{temporal_transformer_all.1} parent=67 // pred_check_branch
          %2464 = sbr.rel (%p2462) target = $region80
        $region79: #{temporal_transformer_all.1} parent=67 // pred_region
          %2465 = dma.done [#allocation4], 256
        $region80: #{temporal_transformer_all.1} parent=67 // pred_fallthru
          _
      $region68: #{temporal_transformer_all.1} parent=5 // pred_fallthru
        _
      %p2466 = scmp.le.s32.totalorder 2, %s19
      // Predicated region
      $region81: #{temporal_transformer_all.1} parent=5 // pred_check
        %p2467 = pneg %p2466
      $region82: #{temporal_transformer_all.1} parent=5 // pred_check_branch
        %2469 = sbr.rel (%p2467) target = $region84
      $region83: #{temporal_transformer_all.1} parent=5 // pred_region
        %s2470 = ssub.s32 %s19, 2
      $region84: #{temporal_transformer_all.1} parent=5 // pred_fallthru
        _
    $region6: #{temporal_transformer_all.1} parent=1 // loop_footer
      %s23 = sadd.s32 1, %s19
    $region7: #{temporal_transformer_all.1} parent=1 // loop_footer_branch
      %18 = sbr.rel target = $region3
    $region8: #{temporal_transformer_all.1} parent=1 // loop_exit
      _
    %2471 = vsyncpa [#allocation4], 1
    %s2472 = scalar_lea.sflag [#allocation4], 1
    %2473 = vsyncpa %s2472, 1

</llo_original>
